<compile_context>
chip_gen: v6e
topology: v6e:2x2x1
jax: 0.10.0
libtpu: 0.0.40
codegen_flags: <defaults>
</compile_context>

<pallas_src>
import functools

import jax
import jax.numpy as jnp
from jax.experimental import pallas as pl
from jax.experimental.pallas import tpu as pltpu


def _silu(x):
    return x * jax.nn.sigmoid(x)


# ---------------------------------------------------------------------------
# Fused C3 kernel: one grid step = one image, everything stays in VMEM/vregs.
# ---------------------------------------------------------------------------
def _c3_fused_kernel(x_ref, w12_ref, b12_ref, wm1_ref, bm1_ref,
                     wm2_ref, bm2_ref, w3a_ref, w3b_ref, b3_ref,
                     masks_ref, o_ref, buf_ref, *, H, W, c_, pad):
    HW = H * W
    x = x_ref[...].astype(jnp.float32)                      # (Cin, HW)

    # cv1 + cv2 fused into one matmul; lane-dense (2c_, HW) output.
    y12 = _silu(jnp.dot(w12_ref[...], x, preferred_element_type=jnp.float32)
                + b12_ref[...])
    y1 = y12[:c_, :]                                         # (c_, HW)
    y2 = y12[c_:, :]                                         # (c_, HW)

    # Bottleneck cv1 (1x1 + SiLU) fused in-register (no HBM round trip).
    b1 = _silu(jnp.dot(wm1_ref[...], y1, preferred_element_type=jnp.float32)
               + bm1_ref[...])                               # (c_, HW)

    # Bottleneck cv2 (3x3 'same' conv): write b1 once into a flat zero-padded
    # VMEM buffer, then read 9 statically shifted lane windows.  The zero halo
    # handles rows falling off the top/bottom; column wrap (dx != 0) is zeroed
    # with precomputed masks.
    @pl.when(pl.program_id(0) == 0)          # scratch persists across images
    def _():
        zpad = jnp.zeros((c_, pad), jnp.float32)
        buf_ref[:, :pad] = zpad
        buf_ref[:, pad + HW:] = zpad

    buf_ref[:, pad:pad + HW] = b1

    masks = masks_ref[...]                                   # (9, 1, HW)
    acc = jnp.zeros((c_, HW), jnp.float32)
    t = 0
    for dy in (-1, 0, 1):
        for dx in (-1, 0, 1):
            d = dy * W + dx
            win = buf_ref[:, pl.ds(pad + d, HW)]             # (c_, HW)
            if dx != 0:                                      # column-wrap mask
                win = win * masks[t]                         # (1, HW) bcast
            acc = acc + jnp.dot(wm2_ref[t], win,
                                preferred_element_type=jnp.float32)
            t += 1
    m = _silu(acc + bm2_ref[...])
    m_out = y1 + m                                           # shortcut add

    # cv3 on the virtual concat([m_out, y2]): split-weight matmuls, no concat.
    out = _silu(jnp.dot(w3a_ref[...], m_out, preferred_element_type=jnp.float32)
                + jnp.dot(w3b_ref[...], y2, preferred_element_type=jnp.float32)
                + b3_ref[...])                               # (c2, HW)
    o_ref[...] = out.astype(o_ref.dtype)


def _make_tap_masks(H, W):
    """(9, 1, H*W) f32 validity masks for the 3x3 'same' conv taps."""
    h = jnp.arange(H)[:, None]
    w = jnp.arange(W)[None, :]
    masks = []
    for dy in (-1, 0, 1):
        for dx in (-1, 0, 1):
            valid = ((h + dy >= 0) & (h + dy < H) &
                     (w + dx >= 0) & (w + dx < W))
            masks.append(valid.reshape(1, H * W))
    return jnp.stack(masks, axis=0).astype(jnp.float32)


def c3_forward(x_nchw, params):
    """x_nchw: (N, Cin, H, W) float32 -> (N, c2, H, W)."""
    N, Cin, H, W = x_nchw.shape
    HW = H * W
    c2 = params["w3a"].shape[0]
    c_ = params["wm1"].shape[0]
    pad = ((W + 1 + 127) // 128) * 128          # lane-aligned halo >= W+1

    # NCHW is already channels-in-sublane / pixels-in-lane once flattened.
    xf = x_nchw.reshape(N, Cin, HW)
    masks = _make_tap_masks(H, W)

    kern = functools.partial(_c3_fused_kernel, H=H, W=W, c_=c_, pad=pad)
    rep2 = lambda n: (0, 0)
    rep3 = lambda n: (0, 0, 0)

    out = pl.pallas_call(
        kern,
        out_shape=jax.ShapeDtypeStruct((N, c2, HW), x_nchw.dtype),
        grid_spec=pltpu.PrefetchScalarGridSpec(
            num_scalar_prefetch=0,
            grid=(N,),
            in_specs=[
                pl.BlockSpec((None, Cin, HW), lambda n: (n, 0, 0)),
                pl.BlockSpec(params["w12"].shape, rep2),
                pl.BlockSpec(params["b12"].shape, rep2),
                pl.BlockSpec(params["wm1"].shape, rep2),
                pl.BlockSpec(params["bm1"].shape, rep2),
                pl.BlockSpec(params["wm2"].shape, rep3),
                pl.BlockSpec(params["bm2"].shape, rep2),
                pl.BlockSpec(params["w3a"].shape, rep2),
                pl.BlockSpec(params["w3b"].shape, rep2),
                pl.BlockSpec(params["b3"].shape, rep2),
                pl.BlockSpec(masks.shape, rep3),
            ],
            out_specs=pl.BlockSpec((None, c2, HW), lambda n: (n, 0, 0)),
            scratch_shapes=[pltpu.VMEM((c_, HW + 2 * pad), jnp.float32)],
        ),
        compiler_params=pltpu.CompilerParams(
            dimension_semantics=("arbitrary",),   # scratch halo reused across N
            vmem_limit_bytes=32 * 1024 * 1024),
    )(xf, params["w12"], params["b12"], params["wm1"], params["bm1"],
      params["wm2"], params["bm2"], params["w3a"], params["w3b"],
      params["b3"], masks)
    return out.reshape(N, c2, H, W)


# ---------------------------------------------------------------------------
# Parameter construction (deterministic, synthetic) and BN folding.
# ---------------------------------------------------------------------------
_BN_EPS = 1e-5


def _init_conv_bn(key, cin, cout, k):
    kw, kg, kb, km, kv = jax.random.split(key, 5)
    w = 0.1 * jax.random.normal(kw, (cout, cin, k, k), jnp.float32)   # OIHW
    gamma = 1.0 + 0.1 * jax.random.normal(kg, (cout,), jnp.float32)
    beta = 0.1 * jax.random.normal(kb, (cout,), jnp.float32)
    mean = 0.1 * jax.random.normal(km, (cout,), jnp.float32)
    var = jnp.abs(jax.random.normal(kv, (cout,), jnp.float32)) + 0.5
    return dict(w=w, gamma=gamma, beta=beta, mean=mean, var=var)


def _fold_bn(p):
    scale = p["gamma"] / jnp.sqrt(p["var"] + _BN_EPS)
    wf = p["w"] * scale[:, None, None, None]              # OIHW
    bf = p["beta"] - p["mean"] * scale
    return wf, bf


def make_c3_params(key, c1, c2, e=0.5):
    c_ = int(c2 * e)
    ks = jax.random.split(key, 5)
    raw = {
        "cv1": _init_conv_bn(ks[0], c1, c_, 1),
        "cv2": _init_conv_bn(ks[1], c1, c_, 1),
        "cv3": _init_conv_bn(ks[2], 2 * c_, c2, 1),
        "m_cv1": _init_conv_bn(ks[3], c_, c_, 1),   # Bottleneck cv1, k=(1,1)
        "m_cv2": _init_conv_bn(ks[4], c_, c_, 3),   # Bottleneck cv2, k=(3,3)
    }
    w_cv1, b_cv1 = _fold_bn(raw["cv1"])
    w_cv2, b_cv2 = _fold_bn(raw["cv2"])
    w_cv3, b_cv3 = _fold_bn(raw["cv3"])
    w_m1, b_m1 = _fold_bn(raw["m_cv1"])
    w_m2, b_m2 = _fold_bn(raw["m_cv2"])               # (c_, c_, 3, 3) OIHW

    folded = {
        # cv1 & cv2 fused: one (2c_, Cin) weight matrix / (2c_, 1) bias.
        "w12": jnp.concatenate([w_cv1[:, :, 0, 0], w_cv2[:, :, 0, 0]], axis=0),
        "b12": jnp.concatenate([b_cv1, b_cv2], axis=0)[:, None],
        "wm1": w_m1[:, :, 0, 0],                      # (c_, c_)
        "bm1": b_m1[:, None],
        # (9, cout, cin), tap order t = (dy+1)*3 + (dx+1)
        "wm2": w_m2.transpose(2, 3, 0, 1).reshape(9, c_, c_),
        "bm2": b_m2[:, None],
        # cv3 split into the m_out half and the y2 half of the concat.
        "w3a": w_cv3[:, :c_, 0, 0],                   # (c2, c_)
        "w3b": w_cv3[:, c_:, 0, 0],                   # (c2, c_)
        "b3": b_cv3[:, None],
    }
    return raw, folded


# ---------------------------------------------------------------------------
# Pure-JAX reference for validation.
# ---------------------------------------------------------------------------
def _ref_conv_bn_silu(x_nchw, p, pad):
    y = jax.lax.conv_general_dilated(
        x_nchw, p["w"], (1, 1), [(pad, pad), (pad, pad)],
        dimension_numbers=("NCHW", "OIHW", "NCHW"))
    scale = p["gamma"] / jnp.sqrt(p["var"] + _BN_EPS)
    bias = p["beta"] - p["mean"] * scale
    y = y * scale[None, :, None, None] + bias[None, :, None, None]
    return y * jax.nn.sigmoid(y)


def c3_reference(x_nchw, raw):
    y1 = _ref_conv_bn_silu(x_nchw, raw["cv1"], 0)
    b1 = _ref_conv_bn_silu(y1, raw["m_cv1"], 0)
    b2 = _ref_conv_bn_silu(b1, raw["m_cv2"], 1)
    m_out = y1 + b2
    y2 = _ref_conv_bn_silu(x_nchw, raw["cv2"], 0)
    cat = jnp.concatenate([m_out, y2], axis=1)
    return _ref_conv_bn_silu(cat, raw["cv3"], 0)


if __name__ == "__main__":
    key = jax.random.PRNGKey(0)
    kx, kp = jax.random.split(key)

    c1, c2 = 4, 8                 # C3(c1=4, c2=8, n=1, shortcut=True, e=0.5)
    N, H, W = 2, 16, 16
    x = jax.random.normal(kx, (N, c1, H, W), jnp.float32)   # NCHW input

    raw_params, folded_params = make_c3_params(kp, c1, c2, e=0.5)

    out = jax.block_until_ready(c3_forward(x, folded_params))

    ref = c3_reference(x, raw_params)
    assert out.shape == (N, c2, H, W), out.shape
    assert jnp.allclose(out, ref, atol=1e-4, rtol=1e-4), \
        float(jnp.max(jnp.abs(out - ref)))

    print("KERNEL_OK")
</pallas_src>

<mosaic_0001>
module attributes {stable_mosaic.version = 11 : i64} {
  func.func @_c3_fused_kernel(%arg0: i32, %arg1: memref<1x4x256xf32, #tpu.memory_space<vmem>>, %arg2: memref<8x4xf32, #tpu.memory_space<vmem>>, %arg3: memref<8x1xf32, #tpu.memory_space<vmem>>, %arg4: memref<4x4xf32, #tpu.memory_space<vmem>>, %arg5: memref<4x1xf32, #tpu.memory_space<vmem>>, %arg6: memref<9x4x4xf32, #tpu.memory_space<vmem>>, %arg7: memref<4x1xf32, #tpu.memory_space<vmem>>, %arg8: memref<8x4xf32, #tpu.memory_space<vmem>>, %arg9: memref<8x4xf32, #tpu.memory_space<vmem>>, %arg10: memref<8x1xf32, #tpu.memory_space<vmem>>, %arg11: memref<9x1x256xf32, #tpu.memory_space<vmem>>, %arg12: memref<1x8x256xf32, #tpu.memory_space<vmem>>, %arg13: memref<4x512xf32, #tpu.memory_space<vmem>>) attributes {dimension_semantics = [#tpu.dimension_semantics<arbitrary>], iteration_bounds = array<i64: 2>, scalar_prefetch = 0 : i64, scratch_operands = 1 : i64, tpu.core_type = #tpu.core_type<tc>, window_params = [{transform_indices = @transform_0, window_bounds = array<i64: 1, 4, 256>}, {pipeline_mode = #tpu.pipeline_mode<synchronous>, transform_indices = @transform_1, window_bounds = array<i64: 8, 4>}, {pipeline_mode = #tpu.pipeline_mode<synchronous>, transform_indices = @transform_2, window_bounds = array<i64: 8, 1>}, {pipeline_mode = #tpu.pipeline_mode<synchronous>, transform_indices = @transform_3, window_bounds = array<i64: 4, 4>}, {pipeline_mode = #tpu.pipeline_mode<synchronous>, transform_indices = @transform_4, window_bounds = array<i64: 4, 1>}, {pipeline_mode = #tpu.pipeline_mode<synchronous>, transform_indices = @transform_5, window_bounds = array<i64: 9, 4, 4>}, {pipeline_mode = #tpu.pipeline_mode<synchronous>, transform_indices = @transform_6, window_bounds = array<i64: 4, 1>}, {pipeline_mode = #tpu.pipeline_mode<synchronous>, transform_indices = @transform_7, window_bounds = array<i64: 8, 4>}, {pipeline_mode = #tpu.pipeline_mode<synchronous>, transform_indices = @transform_8, window_bounds = array<i64: 8, 4>}, {pipeline_mode = #tpu.pipeline_mode<synchronous>, transform_indices = @transform_9, window_bounds = array<i64: 8, 1>}, {pipeline_mode = #tpu.pipeline_mode<synchronous>, transform_indices = @transform_10, window_bounds = array<i64: 9, 1, 256>}, {transform_indices = @transform_11, window_bounds = array<i64: 1, 8, 256>}]} {
    %c0 = arith.constant 0 : index
    %c0_0 = arith.constant 0 : index
    %c0_1 = arith.constant 0 : index
    %0 = vector.load %arg1[%c0, %c0_0, %c0_1] : memref<1x4x256xf32, #tpu.memory_space<vmem>>, vector<1x4x256xf32>
    %1 = vector.shape_cast %0 : vector<1x4x256xf32> to vector<4x256xf32>
    %c0_2 = arith.constant 0 : index
    %c0_3 = arith.constant 0 : index
    %2 = vector.load %arg2[%c0_2, %c0_3] : memref<8x4xf32, #tpu.memory_space<vmem>>, vector<8x4xf32>
    %cst = arith.constant dense<0.000000e+00> : vector<8x256xf32>
    %3 = tpu.matmul %2, %1, %cst {dimension_numbers = #tpu.dot_dimension_numbers<[1], [0], [0], [1], [0, 0, 1, 1], [], []>} : vector<8x4xf32>, vector<4x256xf32>, vector<8x256xf32> -> vector<8x256xf32>
    %c0_4 = arith.constant 0 : index
    %c0_5 = arith.constant 0 : index
    %4 = vector.load %arg3[%c0_4, %c0_5] : memref<8x1xf32, #tpu.memory_space<vmem>>, vector<8x1xf32>
    %5 = vector.broadcast %4 : vector<8x1xf32> to vector<8x256xf32>
    %6 = arith.addf %3, %5 : vector<8x256xf32>
    %7 = arith.negf %6 : vector<8x256xf32>
    %8 = math.exp %7 : vector<8x256xf32>
    %cst_6 = arith.constant 1.000000e+00 : f32
    %9 = vector.broadcast %cst_6 : f32 to vector<8x256xf32>
    %10 = arith.addf %9, %8 : vector<8x256xf32>
    %11 = arith.divf %9, %10 : vector<8x256xf32>
    %12 = arith.mulf %6, %11 : vector<8x256xf32>
    %13 = vector.extract_strided_slice %12 {offsets = [0, 0], sizes = [4, 256], strides = [1, 1]} : vector<8x256xf32> to vector<4x256xf32>
    %14 = vector.extract_strided_slice %12 {offsets = [4, 0], sizes = [4, 256], strides = [1, 1]} : vector<8x256xf32> to vector<4x256xf32>
    %c0_7 = arith.constant 0 : index
    %c0_8 = arith.constant 0 : index
    %15 = vector.load %arg4[%c0_7, %c0_8] : memref<4x4xf32, #tpu.memory_space<vmem>>, vector<4x4xf32>
    %cst_9 = arith.constant dense<0.000000e+00> : vector<4x256xf32>
    %16 = tpu.matmul %15, %13, %cst_9 {dimension_numbers = #tpu.dot_dimension_numbers<[1], [0], [0], [1], [0, 0, 1, 1], [], []>} : vector<4x4xf32>, vector<4x256xf32>, vector<4x256xf32> -> vector<4x256xf32>
    %c0_10 = arith.constant 0 : index
    %c0_11 = arith.constant 0 : index
    %17 = vector.load %arg5[%c0_10, %c0_11] : memref<4x1xf32, #tpu.memory_space<vmem>>, vector<4x1xf32>
    %18 = vector.broadcast %17 : vector<4x1xf32> to vector<4x256xf32>
    %19 = arith.addf %16, %18 : vector<4x256xf32>
    %20 = arith.negf %19 : vector<4x256xf32>
    %21 = math.exp %20 : vector<4x256xf32>
    %cst_12 = arith.constant 1.000000e+00 : f32
    %22 = vector.broadcast %cst_12 : f32 to vector<4x256xf32>
    %23 = arith.addf %22, %21 : vector<4x256xf32>
    %24 = arith.divf %22, %23 : vector<4x256xf32>
    %25 = arith.mulf %19, %24 : vector<4x256xf32>
    %c0_i32 = arith.constant 0 : i32
    %26 = arith.cmpi eq, %arg0, %c0_i32 : i32
    %27 = arith.extui %26 : i1 to i32
    %c0_i32_13 = arith.constant 0 : i32
    %28 = arith.cmpi ne, %27, %c0_i32_13 : i32
    scf.if %28 {
      %cst_72 = arith.constant 0.000000e+00 : f32
      %128 = vector.broadcast %cst_72 : f32 to vector<4x128xf32>
      %c0_73 = arith.constant 0 : index
      %c0_74 = arith.constant 0 : index
      %129 = vector.load %arg13[%c0_73, %c0_74] : memref<4x512xf32, #tpu.memory_space<vmem>>, vector<4x128xf32>
      tpu.vector_store %arg13[%c0_73, %c0_74], %128 {strides = array<i32>} : memref<4x512xf32, #tpu.memory_space<vmem>>, vector<4x128xf32>,
      %c0_75 = arith.constant 0 : index
      %c384 = arith.constant 384 : index
      %130 = vector.load %arg13[%c0_75, %c384] : memref<4x512xf32, #tpu.memory_space<vmem>>, vector<4x128xf32>
      tpu.vector_store %arg13[%c0_75, %c384], %128 {strides = array<i32>} : memref<4x512xf32, #tpu.memory_space<vmem>>, vector<4x128xf32>,
    } else {
    }
    %c0_14 = arith.constant 0 : index
    %c128 = arith.constant 128 : index
    %29 = vector.load %arg13[%c0_14, %c128] : memref<4x512xf32, #tpu.memory_space<vmem>>, vector<4x256xf32>
    tpu.vector_store %arg13[%c0_14, %c128], %25 {strides = array<i32>} : memref<4x512xf32, #tpu.memory_space<vmem>>, vector<4x256xf32>,
    %c0_15 = arith.constant 0 : index
    %c0_16 = arith.constant 0 : index
    %c0_17 = arith.constant 0 : index
    %30 = vector.load %arg11[%c0_15, %c0_16, %c0_17] : memref<9x1x256xf32, #tpu.memory_space<vmem>>, vector<9x1x256xf32>
    %cst_18 = arith.constant 0.000000e+00 : f32
    %31 = vector.broadcast %cst_18 : f32 to vector<4x256xf32>
    %c0_19 = arith.constant 0 : index
    %c111 = arith.constant 111 : index
    %32 = vector.load %arg13[%c0_19, %c111] : memref<4x512xf32, #tpu.memory_space<vmem>>, vector<4x256xf32>
    %33 = vector.extract_strided_slice %30 {offsets = [0, 0, 0], sizes = [1, 1, 256], strides = [1, 1, 1]} : vector<9x1x256xf32> to vector<1x1x256xf32>
    %34 = vector.shape_cast %33 : vector<1x1x256xf32> to vector<1x256xf32>
    %35 = vector.broadcast %34 : vector<1x256xf32> to vector<4x256xf32>
    %36 = arith.mulf %32, %35 : vector<4x256xf32>
    %c0_20 = arith.constant 0 : index
    %c0_21 = arith.constant 0 : index
    %c0_22 = arith.constant 0 : index
    %37 = vector.load %arg6[%c0_20, %c0_21, %c0_22] : memref<9x4x4xf32, #tpu.memory_space<vmem>>, vector<1x4x4xf32>
    %38 = vector.shape_cast %37 : vector<1x4x4xf32> to vector<4x4xf32>
    %cst_23 = arith.constant dense<0.000000e+00> : vector<4x256xf32>
    %39 = tpu.matmul %38, %36, %cst_23 {dimension_numbers = #tpu.dot_dimension_numbers<[1], [0], [0], [1], [0, 0, 1, 1], [], []>} : vector<4x4xf32>, vector<4x256xf32>, vector<4x256xf32> -> vector<4x256xf32>
    %40 = arith.addf %31, %39 : vector<4x256xf32>
    %c0_24 = arith.constant 0 : index
    %c112 = arith.constant 112 : index
    %41 = vector.load %arg13[%c0_24, %c112] : memref<4x512xf32, #tpu.memory_space<vmem>>, vector<4x256xf32>
    %c1 = arith.constant 1 : index
    %c0_25 = arith.constant 0 : index
    %c0_26 = arith.constant 0 : index
    %42 = vector.load %arg6[%c1, %c0_25, %c0_26] : memref<9x4x4xf32, #tpu.memory_space<vmem>>, vector<1x4x4xf32>
    %43 = vector.shape_cast %42 : vector<1x4x4xf32> to vector<4x4xf32>
    %cst_27 = arith.constant dense<0.000000e+00> : vector<4x256xf32>
    %44 = tpu.matmul %43, %41, %cst_27 {dimension_numbers = #tpu.dot_dimension_numbers<[1], [0], [0], [1], [0, 0, 1, 1], [], []>} : vector<4x4xf32>, vector<4x256xf32>, vector<4x256xf32> -> vector<4x256xf32>
    %45 = arith.addf %40, %44 : vector<4x256xf32>
    %c0_28 = arith.constant 0 : index
    %c113 = arith.constant 113 : index
    %46 = vector.load %arg13[%c0_28, %c113] : memref<4x512xf32, #tpu.memory_space<vmem>>, vector<4x256xf32>
    %47 = vector.extract_strided_slice %30 {offsets = [2, 0, 0], sizes = [1, 1, 256], strides = [1, 1, 1]} : vector<9x1x256xf32> to vector<1x1x256xf32>
    %48 = vector.shape_cast %47 : vector<1x1x256xf32> to vector<1x256xf32>
    %49 = vector.broadcast %48 : vector<1x256xf32> to vector<4x256xf32>
    %50 = arith.mulf %46, %49 : vector<4x256xf32>
    %c2 = arith.constant 2 : index
    %c0_29 = arith.constant 0 : index
    %c0_30 = arith.constant 0 : index
    %51 = vector.load %arg6[%c2, %c0_29, %c0_30] : memref<9x4x4xf32, #tpu.memory_space<vmem>>, vector<1x4x4xf32>
    %52 = vector.shape_cast %51 : vector<1x4x4xf32> to vector<4x4xf32>
    %cst_31 = arith.constant dense<0.000000e+00> : vector<4x256xf32>
    %53 = tpu.matmul %52, %50, %cst_31 {dimension_numbers = #tpu.dot_dimension_numbers<[1], [0], [0], [1], [0, 0, 1, 1], [], []>} : vector<4x4xf32>, vector<4x256xf32>, vector<4x256xf32> -> vector<4x256xf32>
    %54 = arith.addf %45, %53 : vector<4x256xf32>
    %c0_32 = arith.constant 0 : index
    %c127 = arith.constant 127 : index
    %55 = vector.load %arg13[%c0_32, %c127] : memref<4x512xf32, #tpu.memory_space<vmem>>, vector<4x256xf32>
    %56 = vector.extract_strided_slice %30 {offsets = [3, 0, 0], sizes = [1, 1, 256], strides = [1, 1, 1]} : vector<9x1x256xf32> to vector<1x1x256xf32>
    %57 = vector.shape_cast %56 : vector<1x1x256xf32> to vector<1x256xf32>
    %58 = vector.broadcast %57 : vector<1x256xf32> to vector<4x256xf32>
    %59 = arith.mulf %55, %58 : vector<4x256xf32>
    %c3 = arith.constant 3 : index
    %c0_33 = arith.constant 0 : index
    %c0_34 = arith.constant 0 : index
    %60 = vector.load %arg6[%c3, %c0_33, %c0_34] : memref<9x4x4xf32, #tpu.memory_space<vmem>>, vector<1x4x4xf32>
    %61 = vector.shape_cast %60 : vector<1x4x4xf32> to vector<4x4xf32>
    %cst_35 = arith.constant dense<0.000000e+00> : vector<4x256xf32>
    %62 = tpu.matmul %61, %59, %cst_35 {dimension_numbers = #tpu.dot_dimension_numbers<[1], [0], [0], [1], [0, 0, 1, 1], [], []>} : vector<4x4xf32>, vector<4x256xf32>, vector<4x256xf32> -> vector<4x256xf32>
    %63 = arith.addf %54, %62 : vector<4x256xf32>
    %c0_36 = arith.constant 0 : index
    %c128_37 = arith.constant 128 : index
    %64 = vector.load %arg13[%c0_36, %c128_37] : memref<4x512xf32, #tpu.memory_space<vmem>>, vector<4x256xf32>
    %c4 = arith.constant 4 : index
    %c0_38 = arith.constant 0 : index
    %c0_39 = arith.constant 0 : index
    %65 = vector.load %arg6[%c4, %c0_38, %c0_39] : memref<9x4x4xf32, #tpu.memory_space<vmem>>, vector<1x4x4xf32>
    %66 = vector.shape_cast %65 : vector<1x4x4xf32> to vector<4x4xf32>
    %cst_40 = arith.constant dense<0.000000e+00> : vector<4x256xf32>
    %67 = tpu.matmul %66, %64, %cst_40 {dimension_numbers = #tpu.dot_dimension_numbers<[1], [0], [0], [1], [0, 0, 1, 1], [], []>} : vector<4x4xf32>, vector<4x256xf32>, vector<4x256xf32> -> vector<4x256xf32>
    %68 = arith.addf %63, %67 : vector<4x256xf32>
    %c0_41 = arith.constant 0 : index
    %c129 = arith.constant 129 : index
    %69 = vector.load %arg13[%c0_41, %c129] : memref<4x512xf32, #tpu.memory_space<vmem>>, vector<4x256xf32>
    %70 = vector.extract_strided_slice %30 {offsets = [5, 0, 0], sizes = [1, 1, 256], strides = [1, 1, 1]} : vector<9x1x256xf32> to vector<1x1x256xf32>
    %71 = vector.shape_cast %70 : vector<1x1x256xf32> to vector<1x256xf32>
    %72 = vector.broadcast %71 : vector<1x256xf32> to vector<4x256xf32>
    %73 = arith.mulf %69, %72 : vector<4x256xf32>
    %c5 = arith.constant 5 : index
    %c0_42 = arith.constant 0 : index
    %c0_43 = arith.constant 0 : index
    %74 = vector.load %arg6[%c5, %c0_42, %c0_43] : memref<9x4x4xf32, #tpu.memory_space<vmem>>, vector<1x4x4xf32>
    %75 = vector.shape_cast %74 : vector<1x4x4xf32> to vector<4x4xf32>
    %cst_44 = arith.constant dense<0.000000e+00> : vector<4x256xf32>
    %76 = tpu.matmul %75, %73, %cst_44 {dimension_numbers = #tpu.dot_dimension_numbers<[1], [0], [0], [1], [0, 0, 1, 1], [], []>} : vector<4x4xf32>, vector<4x256xf32>, vector<4x256xf32> -> vector<4x256xf32>
    %77 = arith.addf %68, %76 : vector<4x256xf32>
    %c0_45 = arith.constant 0 : index
    %c143 = arith.constant 143 : index
    %78 = vector.load %arg13[%c0_45, %c143] : memref<4x512xf32, #tpu.memory_space<vmem>>, vector<4x256xf32>
    %79 = vector.extract_strided_slice %30 {offsets = [6, 0, 0], sizes = [1, 1, 256], strides = [1, 1, 1]} : vector<9x1x256xf32> to vector<1x1x256xf32>
    %80 = vector.shape_cast %79 : vector<1x1x256xf32> to vector<1x256xf32>
    %81 = vector.broadcast %80 : vector<1x256xf32> to vector<4x256xf32>
    %82 = arith.mulf %78, %81 : vector<4x256xf32>
    %c6 = arith.constant 6 : index
    %c0_46 = arith.constant 0 : index
    %c0_47 = arith.constant 0 : index
    %83 = vector.load %arg6[%c6, %c0_46, %c0_47] : memref<9x4x4xf32, #tpu.memory_space<vmem>>, vector<1x4x4xf32>
    %84 = vector.shape_cast %83 : vector<1x4x4xf32> to vector<4x4xf32>
    %cst_48 = arith.constant dense<0.000000e+00> : vector<4x256xf32>
    %85 = tpu.matmul %84, %82, %cst_48 {dimension_numbers = #tpu.dot_dimension_numbers<[1], [0], [0], [1], [0, 0, 1, 1], [], []>} : vector<4x4xf32>, vector<4x256xf32>, vector<4x256xf32> -> vector<4x256xf32>
    %86 = arith.addf %77, %85 : vector<4x256xf32>
    %c0_49 = arith.constant 0 : index
    %c144 = arith.constant 144 : index
    %87 = vector.load %arg13[%c0_49, %c144] : memref<4x512xf32, #tpu.memory_space<vmem>>, vector<4x256xf32>
    %c7 = arith.constant 7 : index
    %c0_50 = arith.constant 0 : index
    %c0_51 = arith.constant 0 : index
    %88 = vector.load %arg6[%c7, %c0_50, %c0_51] : memref<9x4x4xf32, #tpu.memory_space<vmem>>, vector<1x4x4xf32>
    %89 = vector.shape_cast %88 : vector<1x4x4xf32> to vector<4x4xf32>
    %cst_52 = arith.constant dense<0.000000e+00> : vector<4x256xf32>
    %90 = tpu.matmul %89, %87, %cst_52 {dimension_numbers = #tpu.dot_dimension_numbers<[1], [0], [0], [1], [0, 0, 1, 1], [], []>} : vector<4x4xf32>, vector<4x256xf32>, vector<4x256xf32> -> vector<4x256xf32>
    %91 = arith.addf %86, %90 : vector<4x256xf32>
    %c0_53 = arith.constant 0 : index
    %c145 = arith.constant 145 : index
    %92 = vector.load %arg13[%c0_53, %c145] : memref<4x512xf32, #tpu.memory_space<vmem>>, vector<4x256xf32>
    %93 = vector.extract_strided_slice %30 {offsets = [8, 0, 0], sizes = [1, 1, 256], strides = [1, 1, 1]} : vector<9x1x256xf32> to vector<1x1x256xf32>
    %94 = vector.shape_cast %93 : vector<1x1x256xf32> to vector<1x256xf32>
    %95 = vector.broadcast %94 : vector<1x256xf32> to vector<4x256xf32>
    %96 = arith.mulf %92, %95 : vector<4x256xf32>
    %c8 = arith.constant 8 : index
    %c0_54 = arith.constant 0 : index
    %c0_55 = arith.constant 0 : index
    %97 = vector.load %arg6[%c8, %c0_54, %c0_55] : memref<9x4x4xf32, #tpu.memory_space<vmem>>, vector<1x4x4xf32>
    %98 = vector.shape_cast %97 : vector<1x4x4xf32> to vector<4x4xf32>
    %cst_56 = arith.constant dense<0.000000e+00> : vector<4x256xf32>
    %99 = tpu.matmul %98, %96, %cst_56 {dimension_numbers = #tpu.dot_dimension_numbers<[1], [0], [0], [1], [0, 0, 1, 1], [], []>} : vector<4x4xf32>, vector<4x256xf32>, vector<4x256xf32> -> vector<4x256xf32>
    %100 = arith.addf %91, %99 : vector<4x256xf32>
    %c0_57 = arith.constant 0 : index
    %c0_58 = arith.constant 0 : index
    %101 = vector.load %arg7[%c0_57, %c0_58] : memref<4x1xf32, #tpu.memory_space<vmem>>, vector<4x1xf32>
    %102 = vector.broadcast %101 : vector<4x1xf32> to vector<4x256xf32>
    %103 = arith.addf %100, %102 : vector<4x256xf32>
    %104 = arith.negf %103 : vector<4x256xf32>
    %105 = math.exp %104 : vector<4x256xf32>
    %cst_59 = arith.constant 1.000000e+00 : f32
    %106 = vector.broadcast %cst_59 : f32 to vector<4x256xf32>
    %107 = arith.addf %106, %105 : vector<4x256xf32>
    %108 = arith.divf %106, %107 : vector<4x256xf32>
    %109 = arith.mulf %103, %108 : vector<4x256xf32>
    %110 = arith.addf %13, %109 : vector<4x256xf32>
    %c0_60 = arith.constant 0 : index
    %c0_61 = arith.constant 0 : index
    %111 = vector.load %arg8[%c0_60, %c0_61] : memref<8x4xf32, #tpu.memory_space<vmem>>, vector<8x4xf32>
    %cst_62 = arith.constant dense<0.000000e+00> : vector<8x256xf32>
    %112 = tpu.matmul %111, %110, %cst_62 {dimension_numbers = #tpu.dot_dimension_numbers<[1], [0], [0], [1], [0, 0, 1, 1], [], []>} : vector<8x4xf32>, vector<4x256xf32>, vector<8x256xf32> -> vector<8x256xf32>
    %c0_63 = arith.constant 0 : index
    %c0_64 = arith.constant 0 : index
    %113 = vector.load %arg9[%c0_63, %c0_64] : memref<8x4xf32, #tpu.memory_space<vmem>>, vector<8x4xf32>
    %cst_65 = arith.constant dense<0.000000e+00> : vector<8x256xf32>
    %114 = tpu.matmul %113, %14, %cst_65 {dimension_numbers = #tpu.dot_dimension_numbers<[1], [0], [0], [1], [0, 0, 1, 1], [], []>} : vector<8x4xf32>, vector<4x256xf32>, vector<8x256xf32> -> vector<8x256xf32>
    %115 = arith.addf %112, %114 : vector<8x256xf32>
    %c0_66 = arith.constant 0 : index
    %c0_67 = arith.constant 0 : index
    %116 = vector.load %arg10[%c0_66, %c0_67] : memref<8x1xf32, #tpu.memory_space<vmem>>, vector<8x1xf32>
    %117 = vector.broadcast %116 : vector<8x1xf32> to vector<8x256xf32>
    %118 = arith.addf %115, %117 : vector<8x256xf32>
    %119 = arith.negf %118 : vector<8x256xf32>
    %120 = math.exp %119 : vector<8x256xf32>
    %cst_68 = arith.constant 1.000000e+00 : f32
    %121 = vector.broadcast %cst_68 : f32 to vector<8x256xf32>
    %122 = arith.addf %121, %120 : vector<8x256xf32>
    %123 = arith.divf %121, %122 : vector<8x256xf32>
    %124 = arith.mulf %118, %123 : vector<8x256xf32>
    %c0_69 = arith.constant 0 : index
    %c0_70 = arith.constant 0 : index
    %c0_71 = arith.constant 0 : index
    %125 = vector.load %arg12[%c0_69, %c0_70, %c0_71] : memref<1x8x256xf32, #tpu.memory_space<vmem>>, vector<1x8x256xf32>
    %126 = vector.shape_cast %125 : vector<1x8x256xf32> to vector<8x256xf32>
    %127 = vector.shape_cast %124 : vector<8x256xf32> to vector<1x8x256xf32>
    tpu.vector_store %arg12[%c0_69, %c0_70, %c0_71], %127 {strides = array<i32>} : memref<1x8x256xf32, #tpu.memory_space<vmem>>, vector<1x8x256xf32>,
    return
  }
  func.func @transform_0(%arg0: i32) -> (i32, i32, i32) {
    %c0_i32 = arith.constant 0 : i32
    %c0_i32_0 = arith.constant 0 : i32
    %c0_i32_1 = arith.constant 0 : i32
    return %arg0, %c0_i32, %c0_i32_0 : i32, i32, i32
  }
  func.func @transform_1(%arg0: i32) -> (i32, i32) {
    %c0_i32 = arith.constant 0 : i32
    %c0_i32_0 = arith.constant 0 : i32
    %c0_i32_1 = arith.constant 0 : i32
    return %c0_i32, %c0_i32_0 : i32, i32
  }
  func.func @transform_2(%arg0: i32) -> (i32, i32) {
    %c0_i32 = arith.constant 0 : i32
    %c0_i32_0 = arith.constant 0 : i32
    %c0_i32_1 = arith.constant 0 : i32
    return %c0_i32, %c0_i32_0 : i32, i32
  }
  func.func @transform_3(%arg0: i32) -> (i32, i32) {
    %c0_i32 = arith.constant 0 : i32
    %c0_i32_0 = arith.constant 0 : i32
    %c0_i32_1 = arith.constant 0 : i32
    return %c0_i32, %c0_i32_0 : i32, i32
  }
  func.func @transform_4(%arg0: i32) -> (i32, i32) {
    %c0_i32 = arith.constant 0 : i32
    %c0_i32_0 = arith.constant 0 : i32
    %c0_i32_1 = arith.constant 0 : i32
    return %c0_i32, %c0_i32_0 : i32, i32
  }
  func.func @transform_5(%arg0: i32) -> (i32, i32, i32) {
    %c0_i32 = arith.constant 0 : i32
    %c0_i32_0 = arith.constant 0 : i32
    %c0_i32_1 = arith.constant 0 : i32
    %c0_i32_2 = arith.constant 0 : i32
    return %c0_i32, %c0_i32_0, %c0_i32_1 : i32, i32, i32
  }
  func.func @transform_6(%arg0: i32) -> (i32, i32) {
    %c0_i32 = arith.constant 0 : i32
    %c0_i32_0 = arith.constant 0 : i32
    %c0_i32_1 = arith.constant 0 : i32
    return %c0_i32, %c0_i32_0 : i32, i32
  }
  func.func @transform_7(%arg0: i32) -> (i32, i32) {
    %c0_i32 = arith.constant 0 : i32
    %c0_i32_0 = arith.constant 0 : i32
    %c0_i32_1 = arith.constant 0 : i32
    return %c0_i32, %c0_i32_0 : i32, i32
  }
  func.func @transform_8(%arg0: i32) -> (i32, i32) {
    %c0_i32 = arith.constant 0 : i32
    %c0_i32_0 = arith.constant 0 : i32
    %c0_i32_1 = arith.constant 0 : i32
    return %c0_i32, %c0_i32_0 : i32, i32
  }
  func.func @transform_9(%arg0: i32) -> (i32, i32) {
    %c0_i32 = arith.constant 0 : i32
    %c0_i32_0 = arith.constant 0 : i32
    %c0_i32_1 = arith.constant 0 : i32
    return %c0_i32, %c0_i32_0 : i32, i32
  }
  func.func @transform_10(%arg0: i32) -> (i32, i32, i32) {
    %c0_i32 = arith.constant 0 : i32
    %c0_i32_0 = arith.constant 0 : i32
    %c0_i32_1 = arith.constant 0 : i32
    %c0_i32_2 = arith.constant 0 : i32
    return %c0_i32, %c0_i32_0, %c0_i32_1 : i32, i32, i32
  }
  func.func @transform_11(%arg0: i32) -> (i32, i32, i32) {
    %c0_i32 = arith.constant 0 : i32
    %c0_i32_0 = arith.constant 0 : i32
    %c0_i32_1 = arith.constant 0 : i32
    return %arg0, %c0_i32, %c0_i32_0 : i32, i32, i32
  }
}

</mosaic_0001>

<llo_original>
// kernel: tpu_custom_call.1
$region0: #{tpu_custom_call.1}
  #allocation0 [shape = 'u32[]', space=smem, size = 0x4, offset = 0x4, fixed_abs, tag = 'smem constant byte address 0x4 - core index']
  #allocation1 [shape = 'u32[144,128]{1,0:T(1,128)}', space=vmem, size = 0x12000, scoped, tag = 'internal scratch']
  #allocation2 [shape = 'f32[4,512]{1,0:T(4,128)}', space=vmem, size = 0x2000, scoped, tag = 'scratch operand']
  %s0 = inlined_call_operand.vmem [shape: f32[2,4,256], index: 0, kind: input, shape index: {}]
  %s1 = inlined_call_operand.vmem [shape: f32[8,4], index: 1, kind: input, shape index: {}]
  %s2 = inlined_call_operand.vmem [shape: f32[8,1], index: 2, kind: input, shape index: {}]
  %s3 = inlined_call_operand.vmem [shape: f32[4,4], index: 3, kind: input, shape index: {}]
  %s4 = inlined_call_operand.vmem [shape: f32[4,1], index: 4, kind: input, shape index: {}]
  %s5 = inlined_call_operand.vmem [shape: f32[9,4,4], index: 5, kind: input, shape index: {}]
  %s6 = inlined_call_operand.vmem [shape: f32[4,1], index: 6, kind: input, shape index: {}]
  %s7 = inlined_call_operand.vmem [shape: f32[8,4], index: 7, kind: input, shape index: {}]
  %s8 = inlined_call_operand.vmem [shape: f32[8,4], index: 8, kind: input, shape index: {}]
  %s9 = inlined_call_operand.vmem [shape: f32[8,1], index: 9, kind: input, shape index: {}]
  %s10 = inlined_call_operand.vmem [shape: f32[9,1,256], index: 10, kind: input, shape index: {}]
  %s11 = inlined_call_operand.hbm [shape: f32[2,8,256], index: 11, kind: output, shape index: {}]
  %s12 = sld [smem:[#allocation0]]
  $region81: #{tpu_custom_call.1} parent=0
    _
  %s14 = ssub.s32 1, %s12
  %s15 = scalar_select 0, %s14, %s12
  $region1: #{tpu_custom_call.1} parent=0
    #allocation3 [shape = 'u8[16384]{0}', space=vmem, size = 0x4000, scoped, tag = 'output window, operand 0']
    #allocation4 [shape = 's32[2]{0}', space=sflag, size = 0x8, scoped, tag = 'scoped memory for tpu_custom_call.1']
    %16 = vsyncpa [#allocation4], 0
    %s17 = scalar_lea.sflag [#allocation4], 1
    %18 = vsyncpa %s17, 0
    loop: start=0, step=1, limit=4
    $region2: #{tpu_custom_call.1} parent=1 // loop_pre_header
      _
    $region3: #{tpu_custom_call.1} parent=1 // loop_header
      %s20 = sphi 0, %s24
      %p21 = scmp.ge.s32.totalorder %s20, 4
      %s30 = sphi 0, %s32
      %s33 = sphi 0, %s30
      %s34 = sphi 0, %s33
      %s50 = sphi 0, %s34
      %s54 = sphi 0, %s54
      %s56 = sphi 0, %s54
      %s57 = sphi 0, %s56
      %s71 = sphi 0, %s57
      %s75 = sphi 0, %s75
      %s77 = sphi 0, %s75
      %s78 = sphi 0, %s77
      %s92 = sphi 0, %s78
      %s96 = sphi 0, %s96
      %s98 = sphi 0, %s96
      %s99 = sphi 0, %s98
      %s113 = sphi 0, %s99
      %s117 = sphi 0, %s117
      %s119 = sphi 0, %s117
      %s120 = sphi 0, %s119
      %s134 = sphi 0, %s120
      %s138 = sphi 0, %s138
      %s140 = sphi 0, %s138
      %s141 = sphi 0, %s140
      %s155 = sphi 0, %s141
      %s159 = sphi 0, %s159
      %s161 = sphi 0, %s159
      %s162 = sphi 0, %s161
      %s176 = sphi 0, %s162
      %s180 = sphi 0, %s180
      %s182 = sphi 0, %s180
      %s183 = sphi 0, %s182
      %s197 = sphi 0, %s183
      %s201 = sphi 0, %s201
      %s203 = sphi 0, %s201
      %s204 = sphi 0, %s203
      %s218 = sphi 0, %s204
      %s222 = sphi 0, %s222
      %s224 = sphi 0, %s222
      %s225 = sphi 0, %s224
      %s239 = sphi 0, %s225
      %s243 = sphi 0, %s243
      %s245 = sphi 0, %s243
      %s246 = sphi 0, %s245
      %s260 = sphi 0, %s246
      %s266 = sphi 0, %s268
      %s269 = sphi 0, %s266
      %s270 = sphi 0, %s269
      %s286 = sphi 0, %s270
    $region4: #{tpu_custom_call.1} parent=1 // loop_header_branch
      %23 = sbr.rel (%p21) target = $region8
    $region5: #{tpu_custom_call.1} parent=1 // loop_body
      %s25 = ssub.s32 %s20, 1
      %s26 = ssub.s32 %s20, 2
      %s27 = sadd.s32 %s20, 1
      %s28 = ssub.s32 %s20, %s27
      %p29 = scmp.eq.s32.totalorder %s28, 0
      %s31 = sadd.s32 %s30, 1
      %s32 = scalar_select %p29, %s30, %s31
      %p35 = pneg %p29
      %p36 = scmp.eq.s32.totalorder %s20, 1
      %p37 = por %p35, %p36
      %p38 = scmp.ne.s32.totalorder %s30, %s33
      %p39 = scmp.eq.s32.totalorder %s20, 0
      %p40 = por %p38, %p39
      %p41 = scmp.ne.s32.totalorder %s30, %s33
      %p42 = scmp.eq.s32.totalorder %s25, 1
      %p43 = por %p41, %p42
      %p44 = scmp.ne.s32.totalorder %s33, %s34
      %p45 = scmp.eq.s32.totalorder %s25, 0
      %p46 = por %p44, %p45
      %p47 = scmp.ne.s32.totalorder %s33, %s34
      %p48 = scmp.eq.s32.totalorder %s26, 1
      %p49 = por %p47, %p48
      %p51 = scmp.ne.s32.totalorder %s34, %s50
      %p52 = scmp.eq.s32.totalorder %s26, 0
      %p53 = por %p51, %p52
      %s55 = sadd.s32 %s54, 1
      %p58 = scmp.eq.s32.totalorder %s20, 1
      %p59 = scmp.ne.s32.totalorder %s54, %s56
      %p60 = scmp.eq.s32.totalorder %s20, 0
      %p61 = por %p59, %p60
      %p62 = scmp.ne.s32.totalorder %s54, %s56
      %p63 = scmp.eq.s32.totalorder %s25, 1
      %p64 = por %p62, %p63
      %p65 = scmp.ne.s32.totalorder %s56, %s57
      %p66 = scmp.eq.s32.totalorder %s25, 0
      %p67 = por %p65, %p66
      %p68 = scmp.ne.s32.totalorder %s56, %s57
      %p69 = scmp.eq.s32.totalorder %s26, 1
      %p70 = por %p68, %p69
      %p72 = scmp.ne.s32.totalorder %s57, %s71
      %p73 = scmp.eq.s32.totalorder %s26, 0
      %p74 = por %p72, %p73
      %s76 = sadd.s32 %s75, 1
      %p79 = scmp.eq.s32.totalorder %s20, 1
      %p80 = scmp.ne.s32.totalorder %s75, %s77
      %p81 = scmp.eq.s32.totalorder %s20, 0
      %p82 = por %p80, %p81
      %p83 = scmp.ne.s32.totalorder %s75, %s77
      %p84 = scmp.eq.s32.totalorder %s25, 1
      %p85 = por %p83, %p84
      %p86 = scmp.ne.s32.totalorder %s77, %s78
      %p87 = scmp.eq.s32.totalorder %s25, 0
      %p88 = por %p86, %p87
      %p89 = scmp.ne.s32.totalorder %s77, %s78
      %p90 = scmp.eq.s32.totalorder %s26, 1
      %p91 = por %p89, %p90
      %p93 = scmp.ne.s32.totalorder %s78, %s92
      %p94 = scmp.eq.s32.totalorder %s26, 0
      %p95 = por %p93, %p94
      %s97 = sadd.s32 %s96, 1
      %p100 = scmp.eq.s32.totalorder %s20, 1
      %p101 = scmp.ne.s32.totalorder %s96, %s98
      %p102 = scmp.eq.s32.totalorder %s20, 0
      %p103 = por %p101, %p102
      %p104 = scmp.ne.s32.totalorder %s96, %s98
      %p105 = scmp.eq.s32.totalorder %s25, 1
      %p106 = por %p104, %p105
      %p107 = scmp.ne.s32.totalorder %s98, %s99
      %p108 = scmp.eq.s32.totalorder %s25, 0
      %p109 = por %p107, %p108
      %p110 = scmp.ne.s32.totalorder %s98, %s99
      %p111 = scmp.eq.s32.totalorder %s26, 1
      %p112 = por %p110, %p111
      %p114 = scmp.ne.s32.totalorder %s99, %s113
      %p115 = scmp.eq.s32.totalorder %s26, 0
      %p116 = por %p114, %p115
      %s118 = sadd.s32 %s117, 1
      %p121 = scmp.eq.s32.totalorder %s20, 1
      %p122 = scmp.ne.s32.totalorder %s117, %s119
      %p123 = scmp.eq.s32.totalorder %s20, 0
      %p124 = por %p122, %p123
      %p125 = scmp.ne.s32.totalorder %s117, %s119
      %p126 = scmp.eq.s32.totalorder %s25, 1
      %p127 = por %p125, %p126
      %p128 = scmp.ne.s32.totalorder %s119, %s120
      %p129 = scmp.eq.s32.totalorder %s25, 0
      %p130 = por %p128, %p129
      %p131 = scmp.ne.s32.totalorder %s119, %s120
      %p132 = scmp.eq.s32.totalorder %s26, 1
      %p133 = por %p131, %p132
      %p135 = scmp.ne.s32.totalorder %s120, %s134
      %p136 = scmp.eq.s32.totalorder %s26, 0
      %p137 = por %p135, %p136
      %s139 = sadd.s32 %s138, 1
      %p142 = scmp.eq.s32.totalorder %s20, 1
      %p143 = scmp.ne.s32.totalorder %s138, %s140
      %p144 = scmp.eq.s32.totalorder %s20, 0
      %p145 = por %p143, %p144
      %p146 = scmp.ne.s32.totalorder %s138, %s140
      %p147 = scmp.eq.s32.totalorder %s25, 1
      %p148 = por %p146, %p147
      %p149 = scmp.ne.s32.totalorder %s140, %s141
      %p150 = scmp.eq.s32.totalorder %s25, 0
      %p151 = por %p149, %p150
      %p152 = scmp.ne.s32.totalorder %s140, %s141
      %p153 = scmp.eq.s32.totalorder %s26, 1
      %p154 = por %p152, %p153
      %p156 = scmp.ne.s32.totalorder %s141, %s155
      %p157 = scmp.eq.s32.totalorder %s26, 0
      %p158 = por %p156, %p157
      %s160 = sadd.s32 %s159, 1
      %p163 = scmp.eq.s32.totalorder %s20, 1
      %p164 = scmp.ne.s32.totalorder %s159, %s161
      %p165 = scmp.eq.s32.totalorder %s20, 0
      %p166 = por %p164, %p165
      %p167 = scmp.ne.s32.totalorder %s159, %s161
      %p168 = scmp.eq.s32.totalorder %s25, 1
      %p169 = por %p167, %p168
      %p170 = scmp.ne.s32.totalorder %s161, %s162
      %p171 = scmp.eq.s32.totalorder %s25, 0
      %p172 = por %p170, %p171
      %p173 = scmp.ne.s32.totalorder %s161, %s162
      %p174 = scmp.eq.s32.totalorder %s26, 1
      %p175 = por %p173, %p174
      %p177 = scmp.ne.s32.totalorder %s162, %s176
      %p178 = scmp.eq.s32.totalorder %s26, 0
      %p179 = por %p177, %p178
      %s181 = sadd.s32 %s180, 1
      %p184 = scmp.eq.s32.totalorder %s20, 1
      %p185 = scmp.ne.s32.totalorder %s180, %s182
      %p186 = scmp.eq.s32.totalorder %s20, 0
      %p187 = por %p185, %p186
      %p188 = scmp.ne.s32.totalorder %s180, %s182
      %p189 = scmp.eq.s32.totalorder %s25, 1
      %p190 = por %p188, %p189
      %p191 = scmp.ne.s32.totalorder %s182, %s183
      %p192 = scmp.eq.s32.totalorder %s25, 0
      %p193 = por %p191, %p192
      %p194 = scmp.ne.s32.totalorder %s182, %s183
      %p195 = scmp.eq.s32.totalorder %s26, 1
      %p196 = por %p194, %p195
      %p198 = scmp.ne.s32.totalorder %s183, %s197
      %p199 = scmp.eq.s32.totalorder %s26, 0
      %p200 = por %p198, %p199
      %s202 = sadd.s32 %s201, 1
      %p205 = scmp.eq.s32.totalorder %s20, 1
      %p206 = scmp.ne.s32.totalorder %s201, %s203
      %p207 = scmp.eq.s32.totalorder %s20, 0
      %p208 = por %p206, %p207
      %p209 = scmp.ne.s32.totalorder %s201, %s203
      %p210 = scmp.eq.s32.totalorder %s25, 1
      %p211 = por %p209, %p210
      %p212 = scmp.ne.s32.totalorder %s203, %s204
      %p213 = scmp.eq.s32.totalorder %s25, 0
      %p214 = por %p212, %p213
      %p215 = scmp.ne.s32.totalorder %s203, %s204
      %p216 = scmp.eq.s32.totalorder %s26, 1
      %p217 = por %p215, %p216
      %p219 = scmp.ne.s32.totalorder %s204, %s218
      %p220 = scmp.eq.s32.totalorder %s26, 0
      %p221 = por %p219, %p220
      %s223 = sadd.s32 %s222, 1
      %p226 = scmp.eq.s32.totalorder %s20, 1
      %p227 = scmp.ne.s32.totalorder %s222, %s224
      %p228 = scmp.eq.s32.totalorder %s20, 0
      %p229 = por %p227, %p228
      %p230 = scmp.ne.s32.totalorder %s222, %s224
      %p231 = scmp.eq.s32.totalorder %s25, 1
      %p232 = por %p230, %p231
      %p233 = scmp.ne.s32.totalorder %s224, %s225
      %p234 = scmp.eq.s32.totalorder %s25, 0
      %p235 = por %p233, %p234
      %p236 = scmp.ne.s32.totalorder %s224, %s225
      %p237 = scmp.eq.s32.totalorder %s26, 1
      %p238 = por %p236, %p237
      %p240 = scmp.ne.s32.totalorder %s225, %s239
      %p241 = scmp.eq.s32.totalorder %s26, 0
      %p242 = por %p240, %p241
      %s244 = sadd.s32 %s243, 1
      %p247 = scmp.eq.s32.totalorder %s20, 1
      %p248 = scmp.ne.s32.totalorder %s243, %s245
      %p249 = scmp.eq.s32.totalorder %s20, 0
      %p250 = por %p248, %p249
      %p251 = scmp.ne.s32.totalorder %s243, %s245
      %p252 = scmp.eq.s32.totalorder %s25, 1
      %p253 = por %p251, %p252
      %p254 = scmp.ne.s32.totalorder %s245, %s246
      %p255 = scmp.eq.s32.totalorder %s25, 0
      %p256 = por %p254, %p255
      %p257 = scmp.ne.s32.totalorder %s245, %s246
      %p258 = scmp.eq.s32.totalorder %s26, 1
      %p259 = por %p257, %p258
      %p261 = scmp.ne.s32.totalorder %s246, %s260
      %p262 = scmp.eq.s32.totalorder %s26, 0
      %p263 = por %p261, %p262
      %s264 = ssub.s32 %s20, %s27
      %p265 = scmp.eq.s32.totalorder %s264, 0
      %s267 = sadd.s32 %s266, 1
      %s268 = scalar_select %p265, %s266, %s267
      %p271 = pneg %p265
      %p272 = scmp.eq.s32.totalorder %s20, 1
      %p273 = por %p271, %p272
      %p274 = scmp.ne.s32.totalorder %s266, %s269
      %p275 = scmp.eq.s32.totalorder %s20, 0
      %p276 = por %p274, %p275
      %p277 = scmp.ne.s32.totalorder %s266, %s269
      %p278 = scmp.eq.s32.totalorder %s25, 1
      %p279 = por %p277, %p278
      %p280 = scmp.ne.s32.totalorder %s269, %s270
      %p281 = scmp.eq.s32.totalorder %s25, 0
      %p282 = por %p280, %p281
      %p283 = scmp.ne.s32.totalorder %s269, %s270
      %p284 = scmp.eq.s32.totalorder %s26, 1
      %p285 = por %p283, %p284
      %p287 = scmp.ne.s32.totalorder %s270, %s286
      %p288 = scmp.eq.s32.totalorder %s26, 0
      %p289 = por %p287, %p288
      %p290 = scmp.le.s32.totalorder 1, %s20
      %p291 = scmp.lt.s32.totalorder %s20, 3
      %p292 = pnand %p290, %p291
      %p293 = pneg %p292
      // Predicated region
      $region9: #{tpu_custom_call.1} parent=5 // pred_check
        _
      $region10: #{tpu_custom_call.1} parent=5 // pred_check_branch
        %295 = sbr.rel (%p292) target = $region12
      $region11: #{tpu_custom_call.1} parent=5 // pred_region
        %s296 = ssub.s32 %s20, 1
        // Predicated region
        $region13: #{tpu_custom_call.1} parent=11 // pred_check
          %p297 = pneg %p67
        $region14: #{tpu_custom_call.1} parent=11 // pred_check_branch
          %299 = sbr.rel (%p297) target = $region16
        $region15: #{tpu_custom_call.1} parent=11 // pred_region
          _
        $region16: #{tpu_custom_call.1} parent=11 // pred_fallthru
          _
        // Predicated region
        $region17: #{tpu_custom_call.1} parent=11 // pred_check
          %p300 = pneg %p88
        $region18: #{tpu_custom_call.1} parent=11 // pred_check_branch
          %302 = sbr.rel (%p300) target = $region20
        $region19: #{tpu_custom_call.1} parent=11 // pred_region
          _
        $region20: #{tpu_custom_call.1} parent=11 // pred_fallthru
          _
        // Predicated region
        $region21: #{tpu_custom_call.1} parent=11 // pred_check
          %p303 = pneg %p109
        $region22: #{tpu_custom_call.1} parent=11 // pred_check_branch
          %305 = sbr.rel (%p303) target = $region24
        $region23: #{tpu_custom_call.1} parent=11 // pred_region
          _
        $region24: #{tpu_custom_call.1} parent=11 // pred_fallthru
          _
        // Predicated region
        $region25: #{tpu_custom_call.1} parent=11 // pred_check
          %p306 = pneg %p130
        $region26: #{tpu_custom_call.1} parent=11 // pred_check_branch
          %308 = sbr.rel (%p306) target = $region28
        $region27: #{tpu_custom_call.1} parent=11 // pred_region
          _
        $region28: #{tpu_custom_call.1} parent=11 // pred_fallthru
          _
        // Predicated region
        $region29: #{tpu_custom_call.1} parent=11 // pred_check
          %p309 = pneg %p151
        $region30: #{tpu_custom_call.1} parent=11 // pred_check_branch
          %311 = sbr.rel (%p309) target = $region32
        $region31: #{tpu_custom_call.1} parent=11 // pred_region
          _
        $region32: #{tpu_custom_call.1} parent=11 // pred_fallthru
          _
        // Predicated region
        $region33: #{tpu_custom_call.1} parent=11 // pred_check
          %p312 = pneg %p172
        $region34: #{tpu_custom_call.1} parent=11 // pred_check_branch
          %314 = sbr.rel (%p312) target = $region36
        $region35: #{tpu_custom_call.1} parent=11 // pred_region
          _
        $region36: #{tpu_custom_call.1} parent=11 // pred_fallthru
          _
        // Predicated region
        $region37: #{tpu_custom_call.1} parent=11 // pred_check
          %p315 = pneg %p193
        $region38: #{tpu_custom_call.1} parent=11 // pred_check_branch
          %317 = sbr.rel (%p315) target = $region40
        $region39: #{tpu_custom_call.1} parent=11 // pred_region
          _
        $region40: #{tpu_custom_call.1} parent=11 // pred_fallthru
          _
        // Predicated region
        $region41: #{tpu_custom_call.1} parent=11 // pred_check
          %p318 = pneg %p214
        $region42: #{tpu_custom_call.1} parent=11 // pred_check_branch
          %320 = sbr.rel (%p318) target = $region44
        $region43: #{tpu_custom_call.1} parent=11 // pred_region
          _
        $region44: #{tpu_custom_call.1} parent=11 // pred_fallthru
          _
        // Predicated region
        $region45: #{tpu_custom_call.1} parent=11 // pred_check
          %p321 = pneg %p235
        $region46: #{tpu_custom_call.1} parent=11 // pred_check_branch
          %323 = sbr.rel (%p321) target = $region48
        $region47: #{tpu_custom_call.1} parent=11 // pred_region
          _
        $region48: #{tpu_custom_call.1} parent=11 // pred_fallthru
          _
        // Predicated region
        $region49: #{tpu_custom_call.1} parent=11 // pred_check
          %p324 = pneg %p256
        $region50: #{tpu_custom_call.1} parent=11 // pred_check_branch
          %326 = sbr.rel (%p324) target = $region52
        $region51: #{tpu_custom_call.1} parent=11 // pred_region
          _
        $region52: #{tpu_custom_call.1} parent=11 // pred_fallthru
          _
      $region12: #{tpu_custom_call.1} parent=5 // pred_fallthru
        _
      %p327 = scmp.lt.s32.totalorder %s20, 2
      // Predicated region
      $region53: #{tpu_custom_call.1} parent=5 // pred_check
        %p328 = pneg %p327
      $region54: #{tpu_custom_call.1} parent=5 // pred_check_branch
        %330 = sbr.rel (%p328) target = $region56
      $region55: #{tpu_custom_call.1} parent=5 // pred_region
        // Predicated region
        $region57: #{tpu_custom_call.1} parent=55 // pred_check
          %p331 = pneg %p40
        $region58: #{tpu_custom_call.1} parent=55 // pred_check_branch
          %333 = sbr.rel (%p331) target = $region60
        $region59: #{tpu_custom_call.1} parent=55 // pred_region
          %p334 = scmp.lt.s32.totalorder %s20, 1
          %s335 = scalar_select %p334, %s20, 1
          %s336 = smul.addr %s335, 2
          %s337 = smul.addr %s336, 4
          %s338 = scalar_lea.vmem %s0, %s337
        $region60: #{tpu_custom_call.1} parent=55 // pred_fallthru
          _
      $region56: #{tpu_custom_call.1} parent=5 // pred_fallthru
        _
      %p339 = scmp.le.s32.totalorder 1, %s20
      %p340 = scmp.lt.s32.totalorder %s20, 3
      %p341 = pnand %p339, %p340
      %p342 = pneg %p341
      // Predicated region
      $region61: #{tpu_custom_call.1} parent=5 // pred_check
        _
      $region62: #{tpu_custom_call.1} parent=5 // pred_check_branch
        %344 = sbr.rel (%p341) target = $region64
      $region63: #{tpu_custom_call.1} parent=5 // pred_region
        %s345 = ssub.s32 %s20, 1
        %p346 = scmp.lt.s32.totalorder %s25, 1
        %s347 = scalar_select %p346, %s25, 1
        %s348 = smul.addr %s347, 2
        %s349 = smul.addr %s348, 4
        %s350 = scalar_lea.vmem %s0, %s349
        %p351 = pneg %p46
        %p352 = pneg %p43
        %p353 = pneg %p67
        %p354 = pneg %p64
        %p355 = pneg %p88
        %p356 = pneg %p85
        %p357 = pneg %p109
        %p358 = pneg %p106
        %p359 = pneg %p130
        %p360 = pneg %p127
        %p361 = pneg %p151
        %p362 = pneg %p148
        %p363 = pneg %p172
        %p364 = pneg %p169
        %p365 = pneg %p193
        %p366 = pneg %p190
        %p367 = pneg %p214
        %p368 = pneg %p211
        %p369 = pneg %p235
        %p370 = pneg %p232
        %p371 = pneg %p256
        %p372 = pneg %p253
        %p373 = pneg %p282
        %p374 = pneg %p279
        %s375 = sand.u32 %s269, 1
        %s376 = scalar_lea.sflag [#allocation4], %s375
        %s377 = sand.u32 %s269, 1
        %s378 = smul.addr %s377, 16
        %s379 = scalar_lea.vmem [#allocation3], %s378
        %p380 = scmp.lt.s32.totalorder %s25, 1
        %s381 = scalar_select %p380, %s25, 1
        %s382 = smul.addr %s381, 2
        %s383 = smul.addr %s382, 4
        %s384 = scalar_lea.vmem %s0, %s383
        %v385 = vld [vmem:[%s384] sm:$0xff]
        %v386 = vld [vmem:[%s1] sm:$0xff]
        %v387 = vld [vmem:[%s2] sm:$0xff]
        %389 = vset.pattern.permute.xlu0 0
        %390 = vperm.xlu0 %389, %v387
        %v391 = vpop.permute.xlu0 %390
        %v394 = vcombine.high %v385, %v385
        %vm395 = vcmask 31744
        %v397 = vsel %vm395, %v386, 0
        %vm399 = vcmask 1043456
        %v400 = vsel %vm399, %v385, 0
        %v402 = vsel %vm399, %v394, 0
        %404 = vmatprep.subr.mxu0 0.0
        %405 = vmatpush1.msra.mxu0 0.0
        %406 = vmatprep.subr.mxu0 0.0
        %407 = vmatpush1.msra.mxu0 0.0
        %408 = vmatprep.subr.mxu0 0.0
        %409 = vmatpush1.msra.mxu0 0.0
        %410 = vmatprep.subr.mxu0 0.0
        %411 = vmatpush1.msra.mxu0 0.0
        %412 = vmatprep.subr.mxu0 0.0
        %413 = vmatpush1.msra.mxu0 0.0
        %414 = vmatprep.subr.mxu0 0.0
        %415 = vmatpush1.msra.mxu0 0.0
        %416 = vmatprep.subr.mxu0 0.0
        %417 = vmatpush1.msra.mxu0 0.0
        %418 = vmatprep.subr.mxu0 0.0
        %419 = vmatpush1.msra.mxu0 0.0
        %420 = vmatprep.subr.mxu0 0.0
        %421 = vmatpush1.msra.mxu0 0.0
        %422 = vmatprep.subr.mxu0 0.0
        %423 = vmatpush1.msra.mxu0 0.0
        %424 = vmatprep.subr.mxu0 0.0
        %425 = vmatpush1.msra.mxu0 0.0
        %426 = vmatprep.subr.mxu0 0.0
        %427 = vmatpush1.msra.mxu0 0.0
        %428 = vmatprep.subr.mxu0 0.0
        %429 = vmatpush1.msra.mxu0 0.0
        %430 = vmatprep.subr.mxu0 0.0
        %431 = vmatpush1.msra.mxu0 0.0
        %432 = vmatprep.subr.mxu0 0.0
        %433 = vmatpush1.msra.mxu0 0.0
        %434 = vmatprep.subr.mxu0 %v402
        %435 = vmatpush1.msra.mxu0 %v400
        %436 = vmatprep.subr.mxu0 0.0
        %437 = vmatpush2.msra.mxu0 0.0
        %438 = vmatprep.subr.mxu0 0.0
        %439 = vmatpush2.msra.mxu0 0.0
        %440 = vmatprep.subr.mxu0 0.0
        %441 = vmatpush2.msra.mxu0 0.0
        %442 = vmatprep.subr.mxu0 0.0
        %443 = vmatpush2.msra.mxu0 0.0
        %444 = vmatprep.subr.mxu0 0.0
        %445 = vmatpush2.msra.mxu0 0.0
        %446 = vmatprep.subr.mxu0 0.0
        %447 = vmatpush2.msra.mxu0 0.0
        %448 = vmatprep.subr.mxu0 0.0
        %449 = vmatpush2.msra.mxu0 0.0
        %450 = vmatprep.subr.mxu0 0.0
        %451 = vmatpush2.msra.mxu0 0.0
        %452 = vmatprep.subr.mxu0 0.0
        %453 = vmatpush2.msra.mxu0 0.0
        %454 = vmatprep.subr.mxu0 0.0
        %455 = vmatpush2.msra.mxu0 0.0
        %456 = vmatprep.subr.mxu0 0.0
        %457 = vmatpush2.msra.mxu0 0.0
        %458 = vmatprep.subr.mxu0 0.0
        %459 = vmatpush2.msra.mxu0 0.0
        %460 = vmatprep.subr.mxu0 0.0
        %461 = vmatpush2.msra.mxu0 0.0
        %462 = vmatprep.subr.mxu0 0.0
        %463 = vmatpush2.msra.mxu0 0.0
        %464 = vmatprep.subr.mxu0 0.0
        %465 = vmatpush2.msra.mxu0 0.0
        %466 = vmatprep.subr.mxu0 0.0
        %467 = vmatpush2.msra.mxu0 0.0
        %468 = vmatprep.mubr.f32.mxu0 0.0
        %469 = vmatmul.mubr.f32.gmra.mxu0 %v397
        %v470 = vpop.f32.mrf.mxu0
        %v471 = vadd.f32 %v391, %v470
        %v472 = vpop.f32.mrf.mxu0
        %v473 = vadd.f32 %v391, %v472
        %474 = vdwg.mxu0
        %v475 = vxor.u32 %v471, 2147483648
        %v476 = vxor.u32 %v473, 2147483648
        %v477 = vmul.f32 %v475, 1.442695
        %v478 = vpow.pop %v477
        %v479 = vmul.f32 %v476, 1.442695
        %v480 = vpow.pop %v479
        %v481 = vadd.f32 %v478, 1.0
        %v482 = vadd.f32 %v480, 1.0
        %v483 = vrcp.pop %v481
        %v484 = vmul.f32 1.0, %v483
        %v485 = vrcp.pop %v482
        %v486 = vmul.f32 1.0, %v485
        %v487 = vmul.f32 %v471, %v484
        %v488 = vmul.f32 %v473, %v486
        %v489 = vld [vmem:[%s3] sm:$0xf]
        %v490 = vld [vmem:[%s4] sm:$0xf]
        %492 = vset.pattern.permute.xlu0 0
        %493 = vperm.xlu0 %492, %v490
        %v494 = vpop.permute.xlu0 %493
        %v497 = vsel %vm395, %v489, 0
        %v500 = vsel %vm399, %v487, 0
        %v503 = vsel %vm399, %v488, 0
        %505 = vmatprep.subr.mxu0 0.0
        %506 = vmatpush1.msra.mxu0 0.0
        %507 = vmatprep.subr.mxu0 0.0
        %508 = vmatpush1.msra.mxu0 0.0
        %509 = vmatprep.subr.mxu0 0.0
        %510 = vmatpush1.msra.mxu0 0.0
        %511 = vmatprep.subr.mxu0 0.0
        %512 = vmatpush1.msra.mxu0 0.0
        %513 = vmatprep.subr.mxu0 0.0
        %514 = vmatpush1.msra.mxu0 0.0
        %515 = vmatprep.subr.mxu0 0.0
        %516 = vmatpush1.msra.mxu0 0.0
        %517 = vmatprep.subr.mxu0 0.0
        %518 = vmatpush1.msra.mxu0 0.0
        %519 = vmatprep.subr.mxu0 0.0
        %520 = vmatpush1.msra.mxu0 0.0
        %521 = vmatprep.subr.mxu0 0.0
        %522 = vmatpush1.msra.mxu0 0.0
        %523 = vmatprep.subr.mxu0 0.0
        %524 = vmatpush1.msra.mxu0 0.0
        %525 = vmatprep.subr.mxu0 0.0
        %526 = vmatpush1.msra.mxu0 0.0
        %527 = vmatprep.subr.mxu0 0.0
        %528 = vmatpush1.msra.mxu0 0.0
        %529 = vmatprep.subr.mxu0 0.0
        %530 = vmatpush1.msra.mxu0 0.0
        %531 = vmatprep.subr.mxu0 0.0
        %532 = vmatpush1.msra.mxu0 0.0
        %533 = vmatprep.subr.mxu0 0.0
        %534 = vmatpush1.msra.mxu0 0.0
        %535 = vmatprep.subr.mxu0 %v503
        %536 = vmatpush1.msra.mxu0 %v500
        %537 = vmatprep.subr.mxu0 0.0
        %538 = vmatpush2.msra.mxu0 0.0
        %539 = vmatprep.subr.mxu0 0.0
        %540 = vmatpush2.msra.mxu0 0.0
        %541 = vmatprep.subr.mxu0 0.0
        %542 = vmatpush2.msra.mxu0 0.0
        %543 = vmatprep.subr.mxu0 0.0
        %544 = vmatpush2.msra.mxu0 0.0
        %545 = vmatprep.subr.mxu0 0.0
        %546 = vmatpush2.msra.mxu0 0.0
        %547 = vmatprep.subr.mxu0 0.0
        %548 = vmatpush2.msra.mxu0 0.0
        %549 = vmatprep.subr.mxu0 0.0
        %550 = vmatpush2.msra.mxu0 0.0
        %551 = vmatprep.subr.mxu0 0.0
        %552 = vmatpush2.msra.mxu0 0.0
        %553 = vmatprep.subr.mxu0 0.0
        %554 = vmatpush2.msra.mxu0 0.0
        %555 = vmatprep.subr.mxu0 0.0
        %556 = vmatpush2.msra.mxu0 0.0
        %557 = vmatprep.subr.mxu0 0.0
        %558 = vmatpush2.msra.mxu0 0.0
        %559 = vmatprep.subr.mxu0 0.0
        %560 = vmatpush2.msra.mxu0 0.0
        %561 = vmatprep.subr.mxu0 0.0
        %562 = vmatpush2.msra.mxu0 0.0
        %563 = vmatprep.subr.mxu0 0.0
        %564 = vmatpush2.msra.mxu0 0.0
        %565 = vmatprep.subr.mxu0 0.0
        %566 = vmatpush2.msra.mxu0 0.0
        %567 = vmatprep.subr.mxu0 0.0
        %568 = vmatpush2.msra.mxu0 0.0
        %569 = vmatprep.mubr.f32.mxu0 0.0
        %570 = vmatmul.mubr.f32.gmra.mxu0 %v497
        %v571 = vpop.f32.mrf.mxu0
        %v572 = vadd.f32 %v494, %v571
        %v573 = vpop.f32.mrf.mxu0
        %v574 = vadd.f32 %v494, %v573
        %575 = vdwg.mxu0
        %v576 = vxor.u32 %v572, 2147483648
        %v577 = vxor.u32 %v574, 2147483648
        %v578 = vmul.f32 %v576, 1.442695
        %v579 = vpow.pop %v578
        %v580 = vmul.f32 %v577, 1.442695
        %v581 = vpow.pop %v580
        %v582 = vadd.f32 %v579, 1.0
        %v583 = vadd.f32 %v581, 1.0
        %v584 = vrcp.pop %v582
        %v585 = vmul.f32 1.0, %v584
        %v586 = vrcp.pop %v583
        %v587 = vmul.f32 1.0, %v586
        %v588 = vmul.f32 %v572, %v585
        %v589 = vmul.f32 %v574, %v587
        %p590 = scmp.eq.s32.totalorder %s25, 0
        // Predicated region
        $region65: #{tpu_custom_call.1} parent=63 // pred_check
          %p591 = pneg %p590
        $region66: #{tpu_custom_call.1} parent=63 // pred_check_branch
          %593 = sbr.rel (%p591) target = $region68
        $region67: #{tpu_custom_call.1} parent=63 // pred_region
          %594 = vst [vmem:[#allocation2] sm:$0xf] 0.0
          %595 = vst [vmem:[#allocation2 + $0xc] sm:$0xf] 0.0
        $region68: #{tpu_custom_call.1} parent=63 // pred_fallthru
          _
        %v598 = vcombine.low %v588, %v589
        %600 = vst [vmem:[#allocation2 + $0x4] sm:$0xff] %v598
        %v601 = vld [vmem:[%s10] sm:$0x3]
        %v602 = vld [vmem:[%s10 + $0x4] sm:$0x3]
        %v603 = vld [vmem:[%s10 + $0x6] sm:$0x3]
        %v604 = vld [vmem:[%s10 + $0xa] sm:$0x3]
        %v605 = vld [vmem:[%s10 + $0xc] sm:$0x3]
        %v606 = vld [vmem:[%s10 + $0x10] sm:$0x3]
        %v607 = vld [vmem:[#allocation2] sm:$0xff]
        %v608 = vld [vmem:[#allocation2 + $0x8] sm:$0xf]
        %v610 = vlaneseq
        %v611 = vshrl.u32 %v610, 7
        %v612 = vsub.s32 0, %v611
        %v613 = vrot.slane %v601, %v612
        %v614 = vlaneseq
        %v615 = vshrl.u32 %v614, 7
        %v616 = vsub.s32 1, %v615
        %v617 = vrot.slane %v601, %v616
        %v618 = vcombine.low %v613, %v617
        %619 = vrot.lane.b32.xlu0 %v618, 111
        %v620 = vpop.permute.xlu0 %619
        %v621 = vrot.slane %v620, 4
        %vm622 = vcmask 908288
        %v623 = vsel %vm622, %v621, %v620
        %v626 = vmul.f32 %v607, %v623
        %v627 = vmul.f32 %v608, %v621
        %v628 = vld [vmem:[%s5] sm:$0xf]
        %s629 = scalar_lea.vmem %s5, 4
        %v630 = vld [vmem:[%s629] sm:$0xf]
        %v633 = vcombine.high %v607, %v607
        %634 = vrot.lane.b32.xlu0 %v607, 16
        %v635 = vpop.permute.xlu0 %634
        %636 = vrot.lane.b32.xlu0 %v633, 16
        %v637 = vpop.permute.xlu0 %636
        %638 = vrot.lane.b32.xlu0 %v608, 16
        %v639 = vpop.permute.xlu0 %638
        %vm640 = vcmask 130048
        %v641 = vsel %vm640, %v635, %v637
        %v642 = vsel %vm640, %v637, %v639
        %v644 = vsel %vm395, %v630, 0
        %v646 = vsel %vm399, %v641, 0
        %v648 = vsel %vm399, %v642, 0
        %650 = vmatprep.subr.mxu0 0.0
        %651 = vmatpush1.msra.mxu0 0.0
        %652 = vmatprep.subr.mxu0 0.0
        %653 = vmatpush1.msra.mxu0 0.0
        %654 = vmatprep.subr.mxu0 0.0
        %655 = vmatpush1.msra.mxu0 0.0
        %656 = vmatprep.subr.mxu0 0.0
        %657 = vmatpush1.msra.mxu0 0.0
        %658 = vmatprep.subr.mxu0 0.0
        %659 = vmatpush1.msra.mxu0 0.0
        %660 = vmatprep.subr.mxu0 0.0
        %661 = vmatpush1.msra.mxu0 0.0
        %662 = vmatprep.subr.mxu0 0.0
        %663 = vmatpush1.msra.mxu0 0.0
        %664 = vmatprep.subr.mxu0 0.0
        %665 = vmatpush1.msra.mxu0 0.0
        %666 = vmatprep.subr.mxu0 0.0
        %667 = vmatpush1.msra.mxu0 0.0
        %668 = vmatprep.subr.mxu0 0.0
        %669 = vmatpush1.msra.mxu0 0.0
        %670 = vmatprep.subr.mxu0 0.0
        %671 = vmatpush1.msra.mxu0 0.0
        %672 = vmatprep.subr.mxu0 0.0
        %673 = vmatpush1.msra.mxu0 0.0
        %674 = vmatprep.subr.mxu0 0.0
        %675 = vmatpush1.msra.mxu0 0.0
        %676 = vmatprep.subr.mxu0 0.0
        %677 = vmatpush1.msra.mxu0 0.0
        %678 = vmatprep.subr.mxu0 0.0
        %679 = vmatpush1.msra.mxu0 0.0
        %680 = vmatprep.subr.mxu0 %v648
        %681 = vmatpush1.msra.mxu0 %v646
        %682 = vmatprep.subr.mxu0 0.0
        %683 = vmatpush2.msra.mxu0 0.0
        %684 = vmatprep.subr.mxu0 0.0
        %685 = vmatpush2.msra.mxu0 0.0
        %686 = vmatprep.subr.mxu0 0.0
        %687 = vmatpush2.msra.mxu0 0.0
        %688 = vmatprep.subr.mxu0 0.0
        %689 = vmatpush2.msra.mxu0 0.0
        %690 = vmatprep.subr.mxu0 0.0
        %691 = vmatpush2.msra.mxu0 0.0
        %692 = vmatprep.subr.mxu0 0.0
        %693 = vmatpush2.msra.mxu0 0.0
        %694 = vmatprep.subr.mxu0 0.0
        %695 = vmatpush2.msra.mxu0 0.0
        %696 = vmatprep.subr.mxu0 0.0
        %697 = vmatpush2.msra.mxu0 0.0
        %698 = vmatprep.subr.mxu0 0.0
        %699 = vmatpush2.msra.mxu0 0.0
        %700 = vmatprep.subr.mxu0 0.0
        %701 = vmatpush2.msra.mxu0 0.0
        %702 = vmatprep.subr.mxu0 0.0
        %703 = vmatpush2.msra.mxu0 0.0
        %704 = vmatprep.subr.mxu0 0.0
        %705 = vmatpush2.msra.mxu0 0.0
        %706 = vmatprep.subr.mxu0 0.0
        %707 = vmatpush2.msra.mxu0 0.0
        %708 = vmatprep.subr.mxu0 0.0
        %709 = vmatpush2.msra.mxu0 0.0
        %710 = vmatprep.subr.mxu0 0.0
        %711 = vmatpush2.msra.mxu0 0.0
        %712 = vmatprep.subr.mxu0 0.0
        %713 = vmatpush2.msra.mxu0 0.0
        %714 = vmatprep.mubr.f32.mxu0 0.0
        %715 = vmatmul.mubr.f32.gmra.mxu0 %v644
        %v716 = vpop.f32.mrf.mxu0
        %v717 = vadd.f32 0.0, %v716
        %v718 = vpop.f32.mrf.mxu0
        %v719 = vadd.f32 0.0, %v718
        %720 = vdwg.mxu0
        %v723 = vcombine.high %v626, %v626
        %724 = vrot.lane.b32.xlu0 %v626, 17
        %v725 = vpop.permute.xlu0 %724
        %726 = vrot.lane.b32.xlu0 %v723, 17
        %v727 = vpop.permute.xlu0 %726
        %728 = vrot.lane.b32.xlu0 %v627, 17
        %v729 = vpop.permute.xlu0 %728
        %vm730 = vcmask 138240
        %v731 = vsel %vm730, %v725, %v727
        %v732 = vsel %vm730, %v727, %v729
        %v734 = vsel %vm395, %v628, 0
        %v736 = vsel %vm399, %v731, 0
        %v738 = vsel %vm399, %v732, 0
        %740 = vmatprep.subr.mxu0 0.0
        %741 = vmatpush1.msra.mxu0 0.0
        %742 = vmatprep.subr.mxu0 0.0
        %743 = vmatpush1.msra.mxu0 0.0
        %744 = vmatprep.subr.mxu0 0.0
        %745 = vmatpush1.msra.mxu0 0.0
        %746 = vmatprep.subr.mxu0 0.0
        %747 = vmatpush1.msra.mxu0 0.0
        %748 = vmatprep.subr.mxu0 0.0
        %749 = vmatpush1.msra.mxu0 0.0
        %750 = vmatprep.subr.mxu0 0.0
        %751 = vmatpush1.msra.mxu0 0.0
        %752 = vmatprep.subr.mxu0 0.0
        %753 = vmatpush1.msra.mxu0 0.0
        %754 = vmatprep.subr.mxu0 0.0
        %755 = vmatpush1.msra.mxu0 0.0
        %756 = vmatprep.subr.mxu0 0.0
        %757 = vmatpush1.msra.mxu0 0.0
        %758 = vmatprep.subr.mxu0 0.0
        %759 = vmatpush1.msra.mxu0 0.0
        %760 = vmatprep.subr.mxu0 0.0
        %761 = vmatpush1.msra.mxu0 0.0
        %762 = vmatprep.subr.mxu0 0.0
        %763 = vmatpush1.msra.mxu0 0.0
        %764 = vmatprep.subr.mxu0 0.0
        %765 = vmatpush1.msra.mxu0 0.0
        %766 = vmatprep.subr.mxu0 0.0
        %767 = vmatpush1.msra.mxu0 0.0
        %768 = vmatprep.subr.mxu0 0.0
        %769 = vmatpush1.msra.mxu0 0.0
        %770 = vmatprep.subr.mxu0 %v738
        %771 = vmatpush1.msra.mxu0 %v736
        %772 = vmatprep.subr.mxu0 0.0
        %773 = vmatpush2.msra.mxu0 0.0
        %774 = vmatprep.subr.mxu0 0.0
        %775 = vmatpush2.msra.mxu0 0.0
        %776 = vmatprep.subr.mxu0 0.0
        %777 = vmatpush2.msra.mxu0 0.0
        %778 = vmatprep.subr.mxu0 0.0
        %779 = vmatpush2.msra.mxu0 0.0
        %780 = vmatprep.subr.mxu0 0.0
        %781 = vmatpush2.msra.mxu0 0.0
        %782 = vmatprep.subr.mxu0 0.0
        %783 = vmatpush2.msra.mxu0 0.0
        %784 = vmatprep.subr.mxu0 0.0
        %785 = vmatpush2.msra.mxu0 0.0
        %786 = vmatprep.subr.mxu0 0.0
        %787 = vmatpush2.msra.mxu0 0.0
        %788 = vmatprep.subr.mxu0 0.0
        %789 = vmatpush2.msra.mxu0 0.0
        %790 = vmatprep.subr.mxu0 0.0
        %791 = vmatpush2.msra.mxu0 0.0
        %792 = vmatprep.subr.mxu0 0.0
        %793 = vmatpush2.msra.mxu0 0.0
        %794 = vmatprep.subr.mxu0 0.0
        %795 = vmatpush2.msra.mxu0 0.0
        %796 = vmatprep.subr.mxu0 0.0
        %797 = vmatpush2.msra.mxu0 0.0
        %798 = vmatprep.subr.mxu0 0.0
        %799 = vmatpush2.msra.mxu0 0.0
        %800 = vmatprep.subr.mxu0 0.0
        %801 = vmatpush2.msra.mxu0 0.0
        %802 = vmatprep.subr.mxu0 0.0
        %803 = vmatpush2.msra.mxu0 0.0
        %804 = vmatprep.mubr.f32.mxu0 0.0
        %805 = vmatmul.mubr.f32.gmra.mxu0 %v734
        %v806 = vpop.f32.mrf.mxu0
        %v807 = vadd.f32 %v717, %v806
        %v808 = vpop.f32.mrf.mxu0
        %v809 = vadd.f32 %v719, %v808
        %810 = vdwg.mxu0
        %v811 = vld [vmem:[#allocation2] sm:$0xff]
        %v812 = vld [vmem:[#allocation2 + $0x8] sm:$0xf]
        %v814 = vlaneseq
        %v815 = vshrl.u32 %v814, 7
        %v816 = vsub.s32 0, %v815
        %v817 = vrot.slane %v602, %v816
        %v818 = vlaneseq
        %v819 = vshrl.u32 %v818, 7
        %v820 = vsub.s32 1, %v819
        %v821 = vrot.slane %v602, %v820
        %v822 = vcombine.low %v817, %v821
        %823 = vrot.lane.b32.xlu0 %v822, 113
        %v824 = vpop.permute.xlu0 %823
        %v825 = vrot.slane %v824, 4
        %vm826 = vcmask 924672
        %v827 = vsel %vm826, %v825, %v824
        %v830 = vmul.f32 %v811, %v827
        %v831 = vmul.f32 %v812, %v825
        %s832 = scalar_lea.vmem %s5, 8
        %v833 = vld [vmem:[%s832] sm:$0xf]
        %v836 = vcombine.high %v830, %v830
        %837 = vrot.lane.b32.xlu0 %v830, 15
        %v838 = vpop.permute.xlu0 %837
        %839 = vrot.lane.b32.xlu0 %v836, 15
        %v840 = vpop.permute.xlu0 %839
        %841 = vrot.lane.b32.xlu0 %v831, 15
        %v842 = vpop.permute.xlu0 %841
        %vm843 = vcmask 121856
        %v844 = vsel %vm843, %v838, %v840
        %v845 = vsel %vm843, %v840, %v842
        %v847 = vsel %vm395, %v833, 0
        %v849 = vsel %vm399, %v844, 0
        %v851 = vsel %vm399, %v845, 0
        %853 = vmatprep.subr.mxu0 0.0
        %854 = vmatpush1.msra.mxu0 0.0
        %855 = vmatprep.subr.mxu0 0.0
        %856 = vmatpush1.msra.mxu0 0.0
        %857 = vmatprep.subr.mxu0 0.0
        %858 = vmatpush1.msra.mxu0 0.0
        %859 = vmatprep.subr.mxu0 0.0
        %860 = vmatpush1.msra.mxu0 0.0
        %861 = vmatprep.subr.mxu0 0.0
        %862 = vmatpush1.msra.mxu0 0.0
        %863 = vmatprep.subr.mxu0 0.0
        %864 = vmatpush1.msra.mxu0 0.0
        %865 = vmatprep.subr.mxu0 0.0
        %866 = vmatpush1.msra.mxu0 0.0
        %867 = vmatprep.subr.mxu0 0.0
        %868 = vmatpush1.msra.mxu0 0.0
        %869 = vmatprep.subr.mxu0 0.0
        %870 = vmatpush1.msra.mxu0 0.0
        %871 = vmatprep.subr.mxu0 0.0
        %872 = vmatpush1.msra.mxu0 0.0
        %873 = vmatprep.subr.mxu0 0.0
        %874 = vmatpush1.msra.mxu0 0.0
        %875 = vmatprep.subr.mxu0 0.0
        %876 = vmatpush1.msra.mxu0 0.0
        %877 = vmatprep.subr.mxu0 0.0
        %878 = vmatpush1.msra.mxu0 0.0
        %879 = vmatprep.subr.mxu0 0.0
        %880 = vmatpush1.msra.mxu0 0.0
        %881 = vmatprep.subr.mxu0 0.0
        %882 = vmatpush1.msra.mxu0 0.0
        %883 = vmatprep.subr.mxu0 %v851
        %884 = vmatpush1.msra.mxu0 %v849
        %885 = vmatprep.subr.mxu0 0.0
        %886 = vmatpush2.msra.mxu0 0.0
        %887 = vmatprep.subr.mxu0 0.0
        %888 = vmatpush2.msra.mxu0 0.0
        %889 = vmatprep.subr.mxu0 0.0
        %890 = vmatpush2.msra.mxu0 0.0
        %891 = vmatprep.subr.mxu0 0.0
        %892 = vmatpush2.msra.mxu0 0.0
        %893 = vmatprep.subr.mxu0 0.0
        %894 = vmatpush2.msra.mxu0 0.0
        %895 = vmatprep.subr.mxu0 0.0
        %896 = vmatpush2.msra.mxu0 0.0
        %897 = vmatprep.subr.mxu0 0.0
        %898 = vmatpush2.msra.mxu0 0.0
        %899 = vmatprep.subr.mxu0 0.0
        %900 = vmatpush2.msra.mxu0 0.0
        %901 = vmatprep.subr.mxu0 0.0
        %902 = vmatpush2.msra.mxu0 0.0
        %903 = vmatprep.subr.mxu0 0.0
        %904 = vmatpush2.msra.mxu0 0.0
        %905 = vmatprep.subr.mxu0 0.0
        %906 = vmatpush2.msra.mxu0 0.0
        %907 = vmatprep.subr.mxu0 0.0
        %908 = vmatpush2.msra.mxu0 0.0
        %909 = vmatprep.subr.mxu0 0.0
        %910 = vmatpush2.msra.mxu0 0.0
        %911 = vmatprep.subr.mxu0 0.0
        %912 = vmatpush2.msra.mxu0 0.0
        %913 = vmatprep.subr.mxu0 0.0
        %914 = vmatpush2.msra.mxu0 0.0
        %915 = vmatprep.subr.mxu0 0.0
        %916 = vmatpush2.msra.mxu0 0.0
        %917 = vmatprep.mubr.f32.mxu0 0.0
        %918 = vmatmul.mubr.f32.gmra.mxu0 %v847
        %v919 = vpop.f32.mrf.mxu0
        %v920 = vadd.f32 0.0, %v919
        %v921 = vpop.f32.mrf.mxu0
        %v922 = vadd.f32 0.0, %v921
        %923 = vdwg.mxu0
        %v924 = vadd.f32 %v807, %v920
        %v925 = vadd.f32 %v809, %v922
        %v926 = vld [vmem:[#allocation2] sm:$0xff]
        %v927 = vld [vmem:[#allocation2 + $0x8] sm:$0xf]
        %v929 = vlaneseq
        %v930 = vshrl.u32 %v929, 7
        %v931 = vsub.s32 0, %v930
        %v932 = vrot.slane %v603, %v931
        %v933 = vlaneseq
        %v934 = vshrl.u32 %v933, 7
        %v935 = vsub.s32 1, %v934
        %v936 = vrot.slane %v603, %v935
        %v937 = vcombine.low %v932, %v936
        %938 = vrot.lane.b32.xlu0 %v937, 127
        %v939 = vpop.permute.xlu0 %938
        %v940 = vrot.slane %v939, 4
        %vm941 = vcmask 1039360
        %v942 = vsel %vm941, %v940, %v939
        %v945 = vmul.f32 %v926, %v942
        %v946 = vmul.f32 %v927, %v940
        %s947 = scalar_lea.vmem %s5, 12
        %v948 = vld [vmem:[%s947] sm:$0xf]
        %v951 = vcombine.high %v945, %v945
        %952 = vrot.lane.b32.xlu0 %v945, 1
        %v953 = vpop.permute.xlu0 %952
        %954 = vrot.lane.b32.xlu0 %v951, 1
        %v955 = vpop.permute.xlu0 %954
        %956 = vrot.lane.b32.xlu0 %v946, 1
        %v957 = vpop.permute.xlu0 %956
        %vm958 = vcmask 7168
        %v959 = vsel %vm958, %v953, %v955
        %v960 = vsel %vm958, %v955, %v957
        %v962 = vsel %vm395, %v948, 0
        %v964 = vsel %vm399, %v959, 0
        %v966 = vsel %vm399, %v960, 0
        %968 = vmatprep.subr.mxu0 0.0
        %969 = vmatpush1.msra.mxu0 0.0
        %970 = vmatprep.subr.mxu0 0.0
        %971 = vmatpush1.msra.mxu0 0.0
        %972 = vmatprep.subr.mxu0 0.0
        %973 = vmatpush1.msra.mxu0 0.0
        %974 = vmatprep.subr.mxu0 0.0
        %975 = vmatpush1.msra.mxu0 0.0
        %976 = vmatprep.subr.mxu0 0.0
        %977 = vmatpush1.msra.mxu0 0.0
        %978 = vmatprep.subr.mxu0 0.0
        %979 = vmatpush1.msra.mxu0 0.0
        %980 = vmatprep.subr.mxu0 0.0
        %981 = vmatpush1.msra.mxu0 0.0
        %982 = vmatprep.subr.mxu0 0.0
        %983 = vmatpush1.msra.mxu0 0.0
        %984 = vmatprep.subr.mxu0 0.0
        %985 = vmatpush1.msra.mxu0 0.0
        %986 = vmatprep.subr.mxu0 0.0
        %987 = vmatpush1.msra.mxu0 0.0
        %988 = vmatprep.subr.mxu0 0.0
        %989 = vmatpush1.msra.mxu0 0.0
        %990 = vmatprep.subr.mxu0 0.0
        %991 = vmatpush1.msra.mxu0 0.0
        %992 = vmatprep.subr.mxu0 0.0
        %993 = vmatpush1.msra.mxu0 0.0
        %994 = vmatprep.subr.mxu0 0.0
        %995 = vmatpush1.msra.mxu0 0.0
        %996 = vmatprep.subr.mxu0 0.0
        %997 = vmatpush1.msra.mxu0 0.0
        %998 = vmatprep.subr.mxu0 %v966
        %999 = vmatpush1.msra.mxu0 %v964
        %1000 = vmatprep.subr.mxu0 0.0
        %1001 = vmatpush2.msra.mxu0 0.0
        %1002 = vmatprep.subr.mxu0 0.0
        %1003 = vmatpush2.msra.mxu0 0.0
        %1004 = vmatprep.subr.mxu0 0.0
        %1005 = vmatpush2.msra.mxu0 0.0
        %1006 = vmatprep.subr.mxu0 0.0
        %1007 = vmatpush2.msra.mxu0 0.0
        %1008 = vmatprep.subr.mxu0 0.0
        %1009 = vmatpush2.msra.mxu0 0.0
        %1010 = vmatprep.subr.mxu0 0.0
        %1011 = vmatpush2.msra.mxu0 0.0
        %1012 = vmatprep.subr.mxu0 0.0
        %1013 = vmatpush2.msra.mxu0 0.0
        %1014 = vmatprep.subr.mxu0 0.0
        %1015 = vmatpush2.msra.mxu0 0.0
        %1016 = vmatprep.subr.mxu0 0.0
        %1017 = vmatpush2.msra.mxu0 0.0
        %1018 = vmatprep.subr.mxu0 0.0
        %1019 = vmatpush2.msra.mxu0 0.0
        %1020 = vmatprep.subr.mxu0 0.0
        %1021 = vmatpush2.msra.mxu0 0.0
        %1022 = vmatprep.subr.mxu0 0.0
        %1023 = vmatpush2.msra.mxu0 0.0
        %1024 = vmatprep.subr.mxu0 0.0
        %1025 = vmatpush2.msra.mxu0 0.0
        %1026 = vmatprep.subr.mxu0 0.0
        %1027 = vmatpush2.msra.mxu0 0.0
        %1028 = vmatprep.subr.mxu0 0.0
        %1029 = vmatpush2.msra.mxu0 0.0
        %1030 = vmatprep.subr.mxu0 0.0
        %1031 = vmatpush2.msra.mxu0 0.0
        %1032 = vmatprep.mubr.f32.mxu0 0.0
        %1033 = vmatmul.mubr.f32.gmra.mxu0 %v962
        %v1034 = vpop.f32.mrf.mxu0
        %v1035 = vadd.f32 0.0, %v1034
        %v1036 = vpop.f32.mrf.mxu0
        %v1037 = vadd.f32 0.0, %v1036
        %1038 = vdwg.mxu0
        %v1039 = vadd.f32 %v924, %v1035
        %v1040 = vadd.f32 %v925, %v1037
        %v1041 = vld [vmem:[#allocation2 + $0x4] sm:$0xff]
        %s1042 = scalar_lea.vmem %s5, 16
        %v1043 = vld [vmem:[%s1042] sm:$0xf]
        %v1045 = vcombine.high %v1041, %v1041
        %v1047 = vsel %vm395, %v1043, 0
        %v1049 = vsel %vm399, %v1041, 0
        %v1051 = vsel %vm399, %v1045, 0
        %1053 = vmatprep.subr.mxu0 0.0
        %1054 = vmatpush1.msra.mxu0 0.0
        %1055 = vmatprep.subr.mxu0 0.0
        %1056 = vmatpush1.msra.mxu0 0.0
        %1057 = vmatprep.subr.mxu0 0.0
        %1058 = vmatpush1.msra.mxu0 0.0
        %1059 = vmatprep.subr.mxu0 0.0
        %1060 = vmatpush1.msra.mxu0 0.0
        %1061 = vmatprep.subr.mxu0 0.0
        %1062 = vmatpush1.msra.mxu0 0.0
        %1063 = vmatprep.subr.mxu0 0.0
        %1064 = vmatpush1.msra.mxu0 0.0
        %1065 = vmatprep.subr.mxu0 0.0
        %1066 = vmatpush1.msra.mxu0 0.0
        %1067 = vmatprep.subr.mxu0 0.0
        %1068 = vmatpush1.msra.mxu0 0.0
        %1069 = vmatprep.subr.mxu0 0.0
        %1070 = vmatpush1.msra.mxu0 0.0
        %1071 = vmatprep.subr.mxu0 0.0
        %1072 = vmatpush1.msra.mxu0 0.0
        %1073 = vmatprep.subr.mxu0 0.0
        %1074 = vmatpush1.msra.mxu0 0.0
        %1075 = vmatprep.subr.mxu0 0.0
        %1076 = vmatpush1.msra.mxu0 0.0
        %1077 = vmatprep.subr.mxu0 0.0
        %1078 = vmatpush1.msra.mxu0 0.0
        %1079 = vmatprep.subr.mxu0 0.0
        %1080 = vmatpush1.msra.mxu0 0.0
        %1081 = vmatprep.subr.mxu0 0.0
        %1082 = vmatpush1.msra.mxu0 0.0
        %1083 = vmatprep.subr.mxu0 %v1051
        %1084 = vmatpush1.msra.mxu0 %v1049
        %1085 = vmatprep.subr.mxu0 0.0
        %1086 = vmatpush2.msra.mxu0 0.0
        %1087 = vmatprep.subr.mxu0 0.0
        %1088 = vmatpush2.msra.mxu0 0.0
        %1089 = vmatprep.subr.mxu0 0.0
        %1090 = vmatpush2.msra.mxu0 0.0
        %1091 = vmatprep.subr.mxu0 0.0
        %1092 = vmatpush2.msra.mxu0 0.0
        %1093 = vmatprep.subr.mxu0 0.0
        %1094 = vmatpush2.msra.mxu0 0.0
        %1095 = vmatprep.subr.mxu0 0.0
        %1096 = vmatpush2.msra.mxu0 0.0
        %1097 = vmatprep.subr.mxu0 0.0
        %1098 = vmatpush2.msra.mxu0 0.0
        %1099 = vmatprep.subr.mxu0 0.0
        %1100 = vmatpush2.msra.mxu0 0.0
        %1101 = vmatprep.subr.mxu0 0.0
        %1102 = vmatpush2.msra.mxu0 0.0
        %1103 = vmatprep.subr.mxu0 0.0
        %1104 = vmatpush2.msra.mxu0 0.0
        %1105 = vmatprep.subr.mxu0 0.0
        %1106 = vmatpush2.msra.mxu0 0.0
        %1107 = vmatprep.subr.mxu0 0.0
        %1108 = vmatpush2.msra.mxu0 0.0
        %1109 = vmatprep.subr.mxu0 0.0
        %1110 = vmatpush2.msra.mxu0 0.0
        %1111 = vmatprep.subr.mxu0 0.0
        %1112 = vmatpush2.msra.mxu0 0.0
        %1113 = vmatprep.subr.mxu0 0.0
        %1114 = vmatpush2.msra.mxu0 0.0
        %1115 = vmatprep.subr.mxu0 0.0
        %1116 = vmatpush2.msra.mxu0 0.0
        %1117 = vmatprep.mubr.f32.mxu0 0.0
        %1118 = vmatmul.mubr.f32.gmra.mxu0 %v1047
        %v1119 = vpop.f32.mrf.mxu0
        %v1120 = vadd.f32 0.0, %v1119
        %v1121 = vpop.f32.mrf.mxu0
        %v1122 = vadd.f32 0.0, %v1121
        %1123 = vdwg.mxu0
        %v1124 = vadd.f32 %v1039, %v1120
        %v1125 = vadd.f32 %v1040, %v1122
        %v1126 = vld [vmem:[#allocation2 + $0x4] sm:$0xff]
        %v1127 = vld [vmem:[#allocation2 + $0xc] sm:$0xf]
        %v1129 = vlaneseq
        %v1130 = vshrl.u32 %v1129, 7
        %v1131 = vsub.s32 0, %v1130
        %v1132 = vrot.slane %v604, %v1131
        %v1133 = vlaneseq
        %v1134 = vshrl.u32 %v1133, 7
        %v1135 = vsub.s32 1, %v1134
        %v1136 = vrot.slane %v604, %v1135
        %v1137 = vcombine.low %v1132, %v1136
        %1138 = vrot.lane.b32.xlu0 %v1137, 1
        %v1139 = vpop.permute.xlu0 %1138
        %v1140 = vrot.slane %v1139, 4
        %v1141 = vsel %vm958, %v1140, %v1139
        %v1144 = vmul.f32 %v1126, %v1141
        %v1145 = vmul.f32 %v1127, %v1140
        %s1146 = scalar_lea.vmem %s5, 20
        %v1147 = vld [vmem:[%s1146] sm:$0xf]
        %v1150 = vcombine.high %v1144, %v1144
        %1151 = vrot.lane.b32.xlu0 %v1144, 127
        %v1152 = vpop.permute.xlu0 %1151
        %1153 = vrot.lane.b32.xlu0 %v1150, 127
        %v1154 = vpop.permute.xlu0 %1153
        %1155 = vrot.lane.b32.xlu0 %v1145, 127
        %v1156 = vpop.permute.xlu0 %1155
        %v1157 = vsel %vm941, %v1152, %v1154
        %v1158 = vsel %vm941, %v1154, %v1156
        %v1160 = vsel %vm395, %v1147, 0
        %v1162 = vsel %vm399, %v1157, 0
        %v1164 = vsel %vm399, %v1158, 0
        %1166 = vmatprep.subr.mxu0 0.0
        %1167 = vmatpush1.msra.mxu0 0.0
        %1168 = vmatprep.subr.mxu0 0.0
        %1169 = vmatpush1.msra.mxu0 0.0
        %1170 = vmatprep.subr.mxu0 0.0
        %1171 = vmatpush1.msra.mxu0 0.0
        %1172 = vmatprep.subr.mxu0 0.0
        %1173 = vmatpush1.msra.mxu0 0.0
        %1174 = vmatprep.subr.mxu0 0.0
        %1175 = vmatpush1.msra.mxu0 0.0
        %1176 = vmatprep.subr.mxu0 0.0
        %1177 = vmatpush1.msra.mxu0 0.0
        %1178 = vmatprep.subr.mxu0 0.0
        %1179 = vmatpush1.msra.mxu0 0.0
        %1180 = vmatprep.subr.mxu0 0.0
        %1181 = vmatpush1.msra.mxu0 0.0
        %1182 = vmatprep.subr.mxu0 0.0
        %1183 = vmatpush1.msra.mxu0 0.0
        %1184 = vmatprep.subr.mxu0 0.0
        %1185 = vmatpush1.msra.mxu0 0.0
        %1186 = vmatprep.subr.mxu0 0.0
        %1187 = vmatpush1.msra.mxu0 0.0
        %1188 = vmatprep.subr.mxu0 0.0
        %1189 = vmatpush1.msra.mxu0 0.0
        %1190 = vmatprep.subr.mxu0 0.0
        %1191 = vmatpush1.msra.mxu0 0.0
        %1192 = vmatprep.subr.mxu0 0.0
        %1193 = vmatpush1.msra.mxu0 0.0
        %1194 = vmatprep.subr.mxu0 0.0
        %1195 = vmatpush1.msra.mxu0 0.0
        %1196 = vmatprep.subr.mxu0 %v1164
        %1197 = vmatpush1.msra.mxu0 %v1162
        %1198 = vmatprep.subr.mxu0 0.0
        %1199 = vmatpush2.msra.mxu0 0.0
        %1200 = vmatprep.subr.mxu0 0.0
        %1201 = vmatpush2.msra.mxu0 0.0
        %1202 = vmatprep.subr.mxu0 0.0
        %1203 = vmatpush2.msra.mxu0 0.0
        %1204 = vmatprep.subr.mxu0 0.0
        %1205 = vmatpush2.msra.mxu0 0.0
        %1206 = vmatprep.subr.mxu0 0.0
        %1207 = vmatpush2.msra.mxu0 0.0
        %1208 = vmatprep.subr.mxu0 0.0
        %1209 = vmatpush2.msra.mxu0 0.0
        %1210 = vmatprep.subr.mxu0 0.0
        %1211 = vmatpush2.msra.mxu0 0.0
        %1212 = vmatprep.subr.mxu0 0.0
        %1213 = vmatpush2.msra.mxu0 0.0
        %1214 = vmatprep.subr.mxu0 0.0
        %1215 = vmatpush2.msra.mxu0 0.0
        %1216 = vmatprep.subr.mxu0 0.0
        %1217 = vmatpush2.msra.mxu0 0.0
        %1218 = vmatprep.subr.mxu0 0.0
        %1219 = vmatpush2.msra.mxu0 0.0
        %1220 = vmatprep.subr.mxu0 0.0
        %1221 = vmatpush2.msra.mxu0 0.0
        %1222 = vmatprep.subr.mxu0 0.0
        %1223 = vmatpush2.msra.mxu0 0.0
        %1224 = vmatprep.subr.mxu0 0.0
        %1225 = vmatpush2.msra.mxu0 0.0
        %1226 = vmatprep.subr.mxu0 0.0
        %1227 = vmatpush2.msra.mxu0 0.0
        %1228 = vmatprep.subr.mxu0 0.0
        %1229 = vmatpush2.msra.mxu0 0.0
        %1230 = vmatprep.mubr.f32.mxu0 0.0
        %1231 = vmatmul.mubr.f32.gmra.mxu0 %v1160
        %v1232 = vpop.f32.mrf.mxu0
        %v1233 = vadd.f32 0.0, %v1232
        %v1234 = vpop.f32.mrf.mxu0
        %v1235 = vadd.f32 0.0, %v1234
        %1236 = vdwg.mxu0
        %v1237 = vadd.f32 %v1124, %v1233
        %v1238 = vadd.f32 %v1125, %v1235
        %v1239 = vld [vmem:[#allocation2 + $0x4] sm:$0xff]
        %v1240 = vld [vmem:[#allocation2 + $0xc] sm:$0xf]
        %v1242 = vlaneseq
        %v1243 = vshrl.u32 %v1242, 7
        %v1244 = vsub.s32 0, %v1243
        %v1245 = vrot.slane %v605, %v1244
        %v1246 = vlaneseq
        %v1247 = vshrl.u32 %v1246, 7
        %v1248 = vsub.s32 1, %v1247
        %v1249 = vrot.slane %v605, %v1248
        %v1250 = vcombine.low %v1245, %v1249
        %1251 = vrot.lane.b32.xlu0 %v1250, 15
        %v1252 = vpop.permute.xlu0 %1251
        %v1253 = vrot.slane %v1252, 4
        %v1254 = vsel %vm843, %v1253, %v1252
        %v1257 = vmul.f32 %v1239, %v1254
        %v1258 = vmul.f32 %v1240, %v1253
        %s1259 = scalar_lea.vmem %s5, 24
        %v1260 = vld [vmem:[%s1259] sm:$0xf]
        %v1263 = vcombine.high %v1257, %v1257
        %1264 = vrot.lane.b32.xlu0 %v1257, 113
        %v1265 = vpop.permute.xlu0 %1264
        %1266 = vrot.lane.b32.xlu0 %v1263, 113
        %v1267 = vpop.permute.xlu0 %1266
        %1268 = vrot.lane.b32.xlu0 %v1258, 113
        %v1269 = vpop.permute.xlu0 %1268
        %v1270 = vsel %vm826, %v1265, %v1267
        %v1271 = vsel %vm826, %v1267, %v1269
        %v1273 = vsel %vm395, %v1260, 0
        %v1275 = vsel %vm399, %v1270, 0
        %v1277 = vsel %vm399, %v1271, 0
        %1279 = vmatprep.subr.mxu0 0.0
        %1280 = vmatpush1.msra.mxu0 0.0
        %1281 = vmatprep.subr.mxu0 0.0
        %1282 = vmatpush1.msra.mxu0 0.0
        %1283 = vmatprep.subr.mxu0 0.0
        %1284 = vmatpush1.msra.mxu0 0.0
        %1285 = vmatprep.subr.mxu0 0.0
        %1286 = vmatpush1.msra.mxu0 0.0
        %1287 = vmatprep.subr.mxu0 0.0
        %1288 = vmatpush1.msra.mxu0 0.0
        %1289 = vmatprep.subr.mxu0 0.0
        %1290 = vmatpush1.msra.mxu0 0.0
        %1291 = vmatprep.subr.mxu0 0.0
        %1292 = vmatpush1.msra.mxu0 0.0
        %1293 = vmatprep.subr.mxu0 0.0
        %1294 = vmatpush1.msra.mxu0 0.0
        %1295 = vmatprep.subr.mxu0 0.0
        %1296 = vmatpush1.msra.mxu0 0.0
        %1297 = vmatprep.subr.mxu0 0.0
        %1298 = vmatpush1.msra.mxu0 0.0
        %1299 = vmatprep.subr.mxu0 0.0
        %1300 = vmatpush1.msra.mxu0 0.0
        %1301 = vmatprep.subr.mxu0 0.0
        %1302 = vmatpush1.msra.mxu0 0.0
        %1303 = vmatprep.subr.mxu0 0.0
        %1304 = vmatpush1.msra.mxu0 0.0
        %1305 = vmatprep.subr.mxu0 0.0
        %1306 = vmatpush1.msra.mxu0 0.0
        %1307 = vmatprep.subr.mxu0 0.0
        %1308 = vmatpush1.msra.mxu0 0.0
        %1309 = vmatprep.subr.mxu0 %v1277
        %1310 = vmatpush1.msra.mxu0 %v1275
        %1311 = vmatprep.subr.mxu0 0.0
        %1312 = vmatpush2.msra.mxu0 0.0
        %1313 = vmatprep.subr.mxu0 0.0
        %1314 = vmatpush2.msra.mxu0 0.0
        %1315 = vmatprep.subr.mxu0 0.0
        %1316 = vmatpush2.msra.mxu0 0.0
        %1317 = vmatprep.subr.mxu0 0.0
        %1318 = vmatpush2.msra.mxu0 0.0
        %1319 = vmatprep.subr.mxu0 0.0
        %1320 = vmatpush2.msra.mxu0 0.0
        %1321 = vmatprep.subr.mxu0 0.0
        %1322 = vmatpush2.msra.mxu0 0.0
        %1323 = vmatprep.subr.mxu0 0.0
        %1324 = vmatpush2.msra.mxu0 0.0
        %1325 = vmatprep.subr.mxu0 0.0
        %1326 = vmatpush2.msra.mxu0 0.0
        %1327 = vmatprep.subr.mxu0 0.0
        %1328 = vmatpush2.msra.mxu0 0.0
        %1329 = vmatprep.subr.mxu0 0.0
        %1330 = vmatpush2.msra.mxu0 0.0
        %1331 = vmatprep.subr.mxu0 0.0
        %1332 = vmatpush2.msra.mxu0 0.0
        %1333 = vmatprep.subr.mxu0 0.0
        %1334 = vmatpush2.msra.mxu0 0.0
        %1335 = vmatprep.subr.mxu0 0.0
        %1336 = vmatpush2.msra.mxu0 0.0
        %1337 = vmatprep.subr.mxu0 0.0
        %1338 = vmatpush2.msra.mxu0 0.0
        %1339 = vmatprep.subr.mxu0 0.0
        %1340 = vmatpush2.msra.mxu0 0.0
        %1341 = vmatprep.subr.mxu0 0.0
        %1342 = vmatpush2.msra.mxu0 0.0
        %1343 = vmatprep.mubr.f32.mxu0 0.0
        %1344 = vmatmul.mubr.f32.gmra.mxu0 %v1273
        %v1345 = vpop.f32.mrf.mxu0
        %v1346 = vadd.f32 0.0, %v1345
        %v1347 = vpop.f32.mrf.mxu0
        %v1348 = vadd.f32 0.0, %v1347
        %1349 = vdwg.mxu0
        %v1350 = vadd.f32 %v1237, %v1346
        %v1351 = vadd.f32 %v1238, %v1348
        %v1352 = vld [vmem:[#allocation2 + $0x4] sm:$0xff]
        %v1353 = vld [vmem:[#allocation2 + $0xc] sm:$0xf]
        %s1354 = scalar_lea.vmem %s5, 28
        %v1355 = vld [vmem:[%s1354] sm:$0xf]
        %v1358 = vcombine.high %v1352, %v1352
        %1359 = vrot.lane.b32.xlu0 %v1352, 112
        %v1360 = vpop.permute.xlu0 %1359
        %1361 = vrot.lane.b32.xlu0 %v1358, 112
        %v1362 = vpop.permute.xlu0 %1361
        %1363 = vrot.lane.b32.xlu0 %v1353, 112
        %v1364 = vpop.permute.xlu0 %1363
        %vm1365 = vcmask 916480
        %v1366 = vsel %vm1365, %v1360, %v1362
        %v1367 = vsel %vm1365, %v1362, %v1364
        %v1369 = vsel %vm395, %v1355, 0
        %v1371 = vsel %vm399, %v1366, 0
        %v1373 = vsel %vm399, %v1367, 0
        %1375 = vmatprep.subr.mxu0 0.0
        %1376 = vmatpush1.msra.mxu0 0.0
        %1377 = vmatprep.subr.mxu0 0.0
        %1378 = vmatpush1.msra.mxu0 0.0
        %1379 = vmatprep.subr.mxu0 0.0
        %1380 = vmatpush1.msra.mxu0 0.0
        %1381 = vmatprep.subr.mxu0 0.0
        %1382 = vmatpush1.msra.mxu0 0.0
        %1383 = vmatprep.subr.mxu0 0.0
        %1384 = vmatpush1.msra.mxu0 0.0
        %1385 = vmatprep.subr.mxu0 0.0
        %1386 = vmatpush1.msra.mxu0 0.0
        %1387 = vmatprep.subr.mxu0 0.0
        %1388 = vmatpush1.msra.mxu0 0.0
        %1389 = vmatprep.subr.mxu0 0.0
        %1390 = vmatpush1.msra.mxu0 0.0
        %1391 = vmatprep.subr.mxu0 0.0
        %1392 = vmatpush1.msra.mxu0 0.0
        %1393 = vmatprep.subr.mxu0 0.0
        %1394 = vmatpush1.msra.mxu0 0.0
        %1395 = vmatprep.subr.mxu0 0.0
        %1396 = vmatpush1.msra.mxu0 0.0
        %1397 = vmatprep.subr.mxu0 0.0
        %1398 = vmatpush1.msra.mxu0 0.0
        %1399 = vmatprep.subr.mxu0 0.0
        %1400 = vmatpush1.msra.mxu0 0.0
        %1401 = vmatprep.subr.mxu0 0.0
        %1402 = vmatpush1.msra.mxu0 0.0
        %1403 = vmatprep.subr.mxu0 0.0
        %1404 = vmatpush1.msra.mxu0 0.0
        %1405 = vmatprep.subr.mxu0 %v1373
        %1406 = vmatpush1.msra.mxu0 %v1371
        %1407 = vmatprep.subr.mxu0 0.0
        %1408 = vmatpush2.msra.mxu0 0.0
        %1409 = vmatprep.subr.mxu0 0.0
        %1410 = vmatpush2.msra.mxu0 0.0
        %1411 = vmatprep.subr.mxu0 0.0
        %1412 = vmatpush2.msra.mxu0 0.0
        %1413 = vmatprep.subr.mxu0 0.0
        %1414 = vmatpush2.msra.mxu0 0.0
        %1415 = vmatprep.subr.mxu0 0.0
        %1416 = vmatpush2.msra.mxu0 0.0
        %1417 = vmatprep.subr.mxu0 0.0
        %1418 = vmatpush2.msra.mxu0 0.0
        %1419 = vmatprep.subr.mxu0 0.0
        %1420 = vmatpush2.msra.mxu0 0.0
        %1421 = vmatprep.subr.mxu0 0.0
        %1422 = vmatpush2.msra.mxu0 0.0
        %1423 = vmatprep.subr.mxu0 0.0
        %1424 = vmatpush2.msra.mxu0 0.0
        %1425 = vmatprep.subr.mxu0 0.0
        %1426 = vmatpush2.msra.mxu0 0.0
        %1427 = vmatprep.subr.mxu0 0.0
        %1428 = vmatpush2.msra.mxu0 0.0
        %1429 = vmatprep.subr.mxu0 0.0
        %1430 = vmatpush2.msra.mxu0 0.0
        %1431 = vmatprep.subr.mxu0 0.0
        %1432 = vmatpush2.msra.mxu0 0.0
        %1433 = vmatprep.subr.mxu0 0.0
        %1434 = vmatpush2.msra.mxu0 0.0
        %1435 = vmatprep.subr.mxu0 0.0
        %1436 = vmatpush2.msra.mxu0 0.0
        %1437 = vmatprep.subr.mxu0 0.0
        %1438 = vmatpush2.msra.mxu0 0.0
        %1439 = vmatprep.mubr.f32.mxu0 0.0
        %1440 = vmatmul.mubr.f32.gmra.mxu0 %v1369
        %v1441 = vpop.f32.mrf.mxu0
        %v1442 = vadd.f32 0.0, %v1441
        %v1443 = vpop.f32.mrf.mxu0
        %v1444 = vadd.f32 0.0, %v1443
        %1445 = vdwg.mxu0
        %v1446 = vadd.f32 %v1350, %v1442
        %v1447 = vadd.f32 %v1351, %v1444
        %v1448 = vld [vmem:[#allocation2 + $0x4] sm:$0xff]
        %v1449 = vld [vmem:[#allocation2 + $0xc] sm:$0xf]
        %v1451 = vlaneseq
        %v1452 = vshrl.u32 %v1451, 7
        %v1453 = vsub.s32 0, %v1452
        %v1454 = vrot.slane %v606, %v1453
        %v1455 = vlaneseq
        %v1456 = vshrl.u32 %v1455, 7
        %v1457 = vsub.s32 1, %v1456
        %v1458 = vrot.slane %v606, %v1457
        %v1459 = vcombine.low %v1454, %v1458
        %1460 = vrot.lane.b32.xlu0 %v1459, 17
        %v1461 = vpop.permute.xlu0 %1460
        %v1462 = vrot.slane %v1461, 4
        %v1463 = vsel %vm730, %v1462, %v1461
        %v1466 = vmul.f32 %v1448, %v1463
        %v1467 = vmul.f32 %v1449, %v1462
        %s1468 = scalar_lea.vmem %s5, 32
        %v1469 = vld [vmem:[%s1468] sm:$0xf]
        %v1472 = vcombine.high %v1466, %v1466
        %1473 = vrot.lane.b32.xlu0 %v1466, 111
        %v1474 = vpop.permute.xlu0 %1473
        %1475 = vrot.lane.b32.xlu0 %v1472, 111
        %v1476 = vpop.permute.xlu0 %1475
        %1477 = vrot.lane.b32.xlu0 %v1467, 111
        %v1478 = vpop.permute.xlu0 %1477
        %v1479 = vsel %vm622, %v1474, %v1476
        %v1480 = vsel %vm622, %v1476, %v1478
        %v1482 = vsel %vm395, %v1469, 0
        %v1484 = vsel %vm399, %v1479, 0
        %v1486 = vsel %vm399, %v1480, 0
        %1488 = vmatprep.subr.mxu0 0.0
        %1489 = vmatpush1.msra.mxu0 0.0
        %1490 = vmatprep.subr.mxu0 0.0
        %1491 = vmatpush1.msra.mxu0 0.0
        %1492 = vmatprep.subr.mxu0 0.0
        %1493 = vmatpush1.msra.mxu0 0.0
        %1494 = vmatprep.subr.mxu0 0.0
        %1495 = vmatpush1.msra.mxu0 0.0
        %1496 = vmatprep.subr.mxu0 0.0
        %1497 = vmatpush1.msra.mxu0 0.0
        %1498 = vmatprep.subr.mxu0 0.0
        %1499 = vmatpush1.msra.mxu0 0.0
        %1500 = vmatprep.subr.mxu0 0.0
        %1501 = vmatpush1.msra.mxu0 0.0
        %1502 = vmatprep.subr.mxu0 0.0
        %1503 = vmatpush1.msra.mxu0 0.0
        %1504 = vmatprep.subr.mxu0 0.0
        %1505 = vmatpush1.msra.mxu0 0.0
        %1506 = vmatprep.subr.mxu0 0.0
        %1507 = vmatpush1.msra.mxu0 0.0
        %1508 = vmatprep.subr.mxu0 0.0
        %1509 = vmatpush1.msra.mxu0 0.0
        %1510 = vmatprep.subr.mxu0 0.0
        %1511 = vmatpush1.msra.mxu0 0.0
        %1512 = vmatprep.subr.mxu0 0.0
        %1513 = vmatpush1.msra.mxu0 0.0
        %1514 = vmatprep.subr.mxu0 0.0
        %1515 = vmatpush1.msra.mxu0 0.0
        %1516 = vmatprep.subr.mxu0 0.0
        %1517 = vmatpush1.msra.mxu0 0.0
        %1518 = vmatprep.subr.mxu0 %v1486
        %1519 = vmatpush1.msra.mxu0 %v1484
        %1520 = vmatprep.subr.mxu0 0.0
        %1521 = vmatpush2.msra.mxu0 0.0
        %1522 = vmatprep.subr.mxu0 0.0
        %1523 = vmatpush2.msra.mxu0 0.0
        %1524 = vmatprep.subr.mxu0 0.0
        %1525 = vmatpush2.msra.mxu0 0.0
        %1526 = vmatprep.subr.mxu0 0.0
        %1527 = vmatpush2.msra.mxu0 0.0
        %1528 = vmatprep.subr.mxu0 0.0
        %1529 = vmatpush2.msra.mxu0 0.0
        %1530 = vmatprep.subr.mxu0 0.0
        %1531 = vmatpush2.msra.mxu0 0.0
        %1532 = vmatprep.subr.mxu0 0.0
        %1533 = vmatpush2.msra.mxu0 0.0
        %1534 = vmatprep.subr.mxu0 0.0
        %1535 = vmatpush2.msra.mxu0 0.0
        %1536 = vmatprep.subr.mxu0 0.0
        %1537 = vmatpush2.msra.mxu0 0.0
        %1538 = vmatprep.subr.mxu0 0.0
        %1539 = vmatpush2.msra.mxu0 0.0
        %1540 = vmatprep.subr.mxu0 0.0
        %1541 = vmatpush2.msra.mxu0 0.0
        %1542 = vmatprep.subr.mxu0 0.0
        %1543 = vmatpush2.msra.mxu0 0.0
        %1544 = vmatprep.subr.mxu0 0.0
        %1545 = vmatpush2.msra.mxu0 0.0
        %1546 = vmatprep.subr.mxu0 0.0
        %1547 = vmatpush2.msra.mxu0 0.0
        %1548 = vmatprep.subr.mxu0 0.0
        %1549 = vmatpush2.msra.mxu0 0.0
        %1550 = vmatprep.subr.mxu0 0.0
        %1551 = vmatpush2.msra.mxu0 0.0
        %1552 = vmatprep.mubr.f32.mxu0 0.0
        %1553 = vmatmul.mubr.f32.gmra.mxu0 %v1482
        %v1554 = vpop.f32.mrf.mxu0
        %v1555 = vadd.f32 0.0, %v1554
        %v1556 = vpop.f32.mrf.mxu0
        %v1557 = vadd.f32 0.0, %v1556
        %1558 = vdwg.mxu0
        %v1559 = vadd.f32 %v1446, %v1555
        %v1560 = vadd.f32 %v1447, %v1557
        %v1561 = vld [vmem:[%s6] sm:$0xf]
        %1563 = vset.pattern.permute.xlu0 0
        %1564 = vperm.xlu0 %1563, %v1561
        %v1565 = vpop.permute.xlu0 %1564
        %v1567 = vadd.f32 %v1559, %v1565
        %v1568 = vadd.f32 %v1560, %v1565
        %v1569 = vxor.u32 %v1567, 2147483648
        %v1570 = vxor.u32 %v1568, 2147483648
        %v1571 = vmul.f32 %v1569, 1.442695
        %v1572 = vpow.pop %v1571
        %v1573 = vmul.f32 %v1570, 1.442695
        %v1574 = vpow.pop %v1573
        %v1575 = vadd.f32 %v1572, 1.0
        %v1576 = vadd.f32 %v1574, 1.0
        %v1577 = vrcp.pop %v1575
        %v1578 = vmul.f32 1.0, %v1577
        %v1579 = vrcp.pop %v1576
        %v1580 = vmul.f32 1.0, %v1579
        %v1581 = vmul.f32 %v1567, %v1578
        %v1582 = vmul.f32 %v1568, %v1580
        %v1583 = vadd.f32 %v487, %v1581
        %v1584 = vadd.f32 %v488, %v1582
        %v1585 = vld [vmem:[%s7] sm:$0xff]
        %v1586 = vld [vmem:[%s8] sm:$0xff]
        %v1587 = vrot.slane %v487, 4
        %v1588 = vrot.slane %v488, 4
        %v1590 = vsel %vm395, %v1586, 0
        %v1592 = vsel %vm399, %v1587, 0
        %v1594 = vsel %vm399, %v1588, 0
        %1596 = vmatprep.subr.mxu0 0.0
        %1597 = vmatpush1.msra.mxu0 0.0
        %1598 = vmatprep.subr.mxu0 0.0
        %1599 = vmatpush1.msra.mxu0 0.0
        %1600 = vmatprep.subr.mxu0 0.0
        %1601 = vmatpush1.msra.mxu0 0.0
        %1602 = vmatprep.subr.mxu0 0.0
        %1603 = vmatpush1.msra.mxu0 0.0
        %1604 = vmatprep.subr.mxu0 0.0
        %1605 = vmatpush1.msra.mxu0 0.0
        %1606 = vmatprep.subr.mxu0 0.0
        %1607 = vmatpush1.msra.mxu0 0.0
        %1608 = vmatprep.subr.mxu0 0.0
        %1609 = vmatpush1.msra.mxu0 0.0
        %1610 = vmatprep.subr.mxu0 0.0
        %1611 = vmatpush1.msra.mxu0 0.0
        %1612 = vmatprep.subr.mxu0 0.0
        %1613 = vmatpush1.msra.mxu0 0.0
        %1614 = vmatprep.subr.mxu0 0.0
        %1615 = vmatpush1.msra.mxu0 0.0
        %1616 = vmatprep.subr.mxu0 0.0
        %1617 = vmatpush1.msra.mxu0 0.0
        %1618 = vmatprep.subr.mxu0 0.0
        %1619 = vmatpush1.msra.mxu0 0.0
        %1620 = vmatprep.subr.mxu0 0.0
        %1621 = vmatpush1.msra.mxu0 0.0
        %1622 = vmatprep.subr.mxu0 0.0
        %1623 = vmatpush1.msra.mxu0 0.0
        %1624 = vmatprep.subr.mxu0 0.0
        %1625 = vmatpush1.msra.mxu0 0.0
        %1626 = vmatprep.subr.mxu0 %v1594
        %1627 = vmatpush1.msra.mxu0 %v1592
        %1628 = vmatprep.subr.mxu0 0.0
        %1629 = vmatpush2.msra.mxu0 0.0
        %1630 = vmatprep.subr.mxu0 0.0
        %1631 = vmatpush2.msra.mxu0 0.0
        %1632 = vmatprep.subr.mxu0 0.0
        %1633 = vmatpush2.msra.mxu0 0.0
        %1634 = vmatprep.subr.mxu0 0.0
        %1635 = vmatpush2.msra.mxu0 0.0
        %1636 = vmatprep.subr.mxu0 0.0
        %1637 = vmatpush2.msra.mxu0 0.0
        %1638 = vmatprep.subr.mxu0 0.0
        %1639 = vmatpush2.msra.mxu0 0.0
        %1640 = vmatprep.subr.mxu0 0.0
        %1641 = vmatpush2.msra.mxu0 0.0
        %1642 = vmatprep.subr.mxu0 0.0
        %1643 = vmatpush2.msra.mxu0 0.0
        %1644 = vmatprep.subr.mxu0 0.0
        %1645 = vmatpush2.msra.mxu0 0.0
        %1646 = vmatprep.subr.mxu0 0.0
        %1647 = vmatpush2.msra.mxu0 0.0
        %1648 = vmatprep.subr.mxu0 0.0
        %1649 = vmatpush2.msra.mxu0 0.0
        %1650 = vmatprep.subr.mxu0 0.0
        %1651 = vmatpush2.msra.mxu0 0.0
        %1652 = vmatprep.subr.mxu0 0.0
        %1653 = vmatpush2.msra.mxu0 0.0
        %1654 = vmatprep.subr.mxu0 0.0
        %1655 = vmatpush2.msra.mxu0 0.0
        %1656 = vmatprep.subr.mxu0 0.0
        %1657 = vmatpush2.msra.mxu0 0.0
        %1658 = vmatprep.subr.mxu0 0.0
        %1659 = vmatpush2.msra.mxu0 0.0
        %1660 = vmatprep.mubr.f32.mxu0 0.0
        %1661 = vmatmul.mubr.f32.gmra.mxu0 %v1590
        %v1662 = vpop.f32.mrf.mxu0
        %v1663 = vadd.f32 0.0, %v1662
        %v1664 = vpop.f32.mrf.mxu0
        %v1665 = vadd.f32 0.0, %v1664
        %1666 = vdwg.mxu0
        %v1668 = vsel %vm395, %v1585, 0
        %v1671 = vsel %vm399, %v1583, 0
        %v1674 = vsel %vm399, %v1584, 0
        %1676 = vmatprep.subr.mxu0 0.0
        %1677 = vmatpush1.msra.mxu0 0.0
        %1678 = vmatprep.subr.mxu0 0.0
        %1679 = vmatpush1.msra.mxu0 0.0
        %1680 = vmatprep.subr.mxu0 0.0
        %1681 = vmatpush1.msra.mxu0 0.0
        %1682 = vmatprep.subr.mxu0 0.0
        %1683 = vmatpush1.msra.mxu0 0.0
        %1684 = vmatprep.subr.mxu0 0.0
        %1685 = vmatpush1.msra.mxu0 0.0
        %1686 = vmatprep.subr.mxu0 0.0
        %1687 = vmatpush1.msra.mxu0 0.0
        %1688 = vmatprep.subr.mxu0 0.0
        %1689 = vmatpush1.msra.mxu0 0.0
        %1690 = vmatprep.subr.mxu0 0.0
        %1691 = vmatpush1.msra.mxu0 0.0
        %1692 = vmatprep.subr.mxu0 0.0
        %1693 = vmatpush1.msra.mxu0 0.0
        %1694 = vmatprep.subr.mxu0 0.0
        %1695 = vmatpush1.msra.mxu0 0.0
        %1696 = vmatprep.subr.mxu0 0.0
        %1697 = vmatpush1.msra.mxu0 0.0
        %1698 = vmatprep.subr.mxu0 0.0
        %1699 = vmatpush1.msra.mxu0 0.0
        %1700 = vmatprep.subr.mxu0 0.0
        %1701 = vmatpush1.msra.mxu0 0.0
        %1702 = vmatprep.subr.mxu0 0.0
        %1703 = vmatpush1.msra.mxu0 0.0
        %1704 = vmatprep.subr.mxu0 0.0
        %1705 = vmatpush1.msra.mxu0 0.0
        %1706 = vmatprep.subr.mxu0 %v1674
        %1707 = vmatpush1.msra.mxu0 %v1671
        %1708 = vmatprep.subr.mxu0 0.0
        %1709 = vmatpush2.msra.mxu0 0.0
        %1710 = vmatprep.subr.mxu0 0.0
        %1711 = vmatpush2.msra.mxu0 0.0
        %1712 = vmatprep.subr.mxu0 0.0
        %1713 = vmatpush2.msra.mxu0 0.0
        %1714 = vmatprep.subr.mxu0 0.0
        %1715 = vmatpush2.msra.mxu0 0.0
        %1716 = vmatprep.subr.mxu0 0.0
        %1717 = vmatpush2.msra.mxu0 0.0
        %1718 = vmatprep.subr.mxu0 0.0
        %1719 = vmatpush2.msra.mxu0 0.0
        %1720 = vmatprep.subr.mxu0 0.0
        %1721 = vmatpush2.msra.mxu0 0.0
        %1722 = vmatprep.subr.mxu0 0.0
        %1723 = vmatpush2.msra.mxu0 0.0
        %1724 = vmatprep.subr.mxu0 0.0
        %1725 = vmatpush2.msra.mxu0 0.0
        %1726 = vmatprep.subr.mxu0 0.0
        %1727 = vmatpush2.msra.mxu0 0.0
        %1728 = vmatprep.subr.mxu0 0.0
        %1729 = vmatpush2.msra.mxu0 0.0
        %1730 = vmatprep.subr.mxu0 0.0
        %1731 = vmatpush2.msra.mxu0 0.0
        %1732 = vmatprep.subr.mxu0 0.0
        %1733 = vmatpush2.msra.mxu0 0.0
        %1734 = vmatprep.subr.mxu0 0.0
        %1735 = vmatpush2.msra.mxu0 0.0
        %1736 = vmatprep.subr.mxu0 0.0
        %1737 = vmatpush2.msra.mxu0 0.0
        %1738 = vmatprep.subr.mxu0 0.0
        %1739 = vmatpush2.msra.mxu0 0.0
        %1740 = vmatprep.mubr.f32.mxu0 0.0
        %1741 = vmatmul.mubr.f32.gmra.mxu0 %v1668
        %v1742 = vpop.f32.mrf.mxu0
        %v1743 = vadd.f32 %v1663, %v1742
        %v1744 = vpop.f32.mrf.mxu0
        %v1745 = vadd.f32 %v1665, %v1744
        %1746 = vdwg.mxu0
        %v1747 = vld [vmem:[%s9] sm:$0xff]
        %1749 = vset.pattern.permute.xlu0 0
        %1750 = vperm.xlu0 %1749, %v1747
        %v1751 = vpop.permute.xlu0 %1750
        %v1753 = vadd.f32 %v1743, %v1751
        %v1754 = vadd.f32 %v1745, %v1751
        %v1755 = vxor.u32 %v1753, 2147483648
        %v1756 = vxor.u32 %v1754, 2147483648
        %v1757 = vmul.f32 %v1755, 1.442695
        %v1758 = vpow.pop %v1757
        %v1759 = vmul.f32 %v1756, 1.442695
        %v1760 = vpow.pop %v1759
        %v1761 = vadd.f32 %v1758, 1.0
        %v1762 = vadd.f32 %v1760, 1.0
        %v1763 = vrcp.pop %v1761
        %v1764 = vmul.f32 1.0, %v1763
        %v1765 = vrcp.pop %v1762
        %v1766 = vmul.f32 1.0, %v1765
        %v1767 = vmul.f32 %v1753, %v1764
        %v1768 = vmul.f32 %v1754, %v1766
        %1769 = vst [vmem:[%s379] sm:$0xff] %v1767
        %1770 = vst [vmem:[%s379 + $0x8] sm:$0xff] %v1768
        %s1771 = sand.u32 %s269, 1
        %s1772 = scalar_lea.sflag [#allocation4], %s1771
        %s1773 = sand.u32 %s269, 1
        %s1774 = smul.addr %s1773, 16
        %s1775 = scalar_lea.vmem [#allocation3], %s1774
        // Predicated region
        $region69: #{tpu_custom_call.1} parent=63 // pred_check
          %p1776 = pneg %p279
        $region70: #{tpu_custom_call.1} parent=63 // pred_check_branch
          %1778 = sbr.rel (%p1776) target = $region72
        $region71: #{tpu_custom_call.1} parent=63 // pred_region
          %s1780 = ssub.s32 256, 256
          %1781 = vsyncadd %s1772, %s1780
          %s1782 = smul.addr %s25, 2
          %s1783 = smul.addr %s1782, 128
          %s1784 = scalar_lea.hbm %s11, %s1783
          %s1786 = sshll.u32 %s1775, 4
          %s1787 = int_to_ptr.vmem [resolvable:$true] %s1786
          %1789 = dma.vmem_to_hbm [thread:$0]  %s1787, 256, %s1784, %s1772
        $region72: #{tpu_custom_call.1} parent=63 // pred_fallthru
          _
      $region64: #{tpu_custom_call.1} parent=5 // pred_fallthru
        _
      %p1790 = scmp.le.s32.totalorder 2, %s20
      // Predicated region
      $region73: #{tpu_custom_call.1} parent=5 // pred_check
        %p1791 = pneg %p1790
      $region74: #{tpu_custom_call.1} parent=5 // pred_check_branch
        %1793 = sbr.rel (%p1791) target = $region76
      $region75: #{tpu_custom_call.1} parent=5 // pred_region
        %s1794 = ssub.s32 %s20, 2
        // Predicated region
        $region77: #{tpu_custom_call.1} parent=75 // pred_check
          %p1795 = pneg %p285
        $region78: #{tpu_custom_call.1} parent=75 // pred_check_branch
          %1797 = sbr.rel (%p1795) target = $region80
        $region79: #{tpu_custom_call.1} parent=75 // pred_region
          %s1798 = sand.u32 %s270, 1
          %s1799 = scalar_lea.sflag [#allocation4], %s1798
          %s1800 = sand.u32 %s270, 1
          %s1801 = smul.addr %s1800, 16
          %s1802 = scalar_lea.vmem [#allocation3], %s1801
          %1803 = dma.done %s1799, 256
        $region80: #{tpu_custom_call.1} parent=75 // pred_fallthru
          _
      $region76: #{tpu_custom_call.1} parent=5 // pred_fallthru
        _
    $region6: #{tpu_custom_call.1} parent=1 // loop_footer
      %s24 = sadd.s32 1, %s20
    $region7: #{tpu_custom_call.1} parent=1 // loop_footer_branch
      %19 = sbr.rel target = $region3
    $region8: #{tpu_custom_call.1} parent=1 // loop_exit
      _
    %1804 = vsyncpa [#allocation4], 1
    %s1805 = scalar_lea.sflag [#allocation4], 1
    %1806 = vsyncpa %s1805, 1

</llo_original>
